<compile_context>
chip_gen: v5e
topology: v5e:2x2
jax: 0.10.0
libtpu: 0.0.40
codegen_flags: <defaults>
</compile_context>

<pallas_src>
import math
from functools import partial

import jax
import jax.numpy as jnp
from jax.experimental import pallas as pl
from jax.experimental.pallas import tpu as pltpu


def _layer_norm(x, gamma, beta, eps=1e-5):
    # single pass: mean and mean-of-squares together; clamp var (can go
    # slightly negative from cancellation) before rsqrt.
    mu = jnp.mean(x, axis=-1, keepdims=True)
    ms = jnp.mean(x * x, axis=-1, keepdims=True)
    var = jnp.maximum(ms - mu * mu, 0.0)
    return (x - mu) * jax.lax.rsqrt(var + eps) * gamma + beta


def encoder_stack_kernel(x_ref, wq_ref, wk_ref, wv_ref, wo_ref, bo_ref,
                         ln1g_ref, ln1b_ref, w1_ref, b1_ref, w2_ref, b2_ref,
                         ln2g_ref, ln2b_ref, o_ref, *, num_heads, dim_k):
    f32 = jnp.float32
    layer = pl.program_id(1)

    BT, S, D = o_ref.shape
    R = BT * S
    H, dk = num_heads, dim_k

    # Layer 0 of each batch tile: seed the VMEM-resident activation (o_ref)
    # with the input block.  For l > 0, o_ref already holds layer l-1's output.
    @pl.when(layer == 0)
    def _():
        o_ref[...] = x_ref[...]

    x3 = o_ref[...]                              # (BT, S, D), native dtype
    in_dt = x3.dtype
    x2 = x3.reshape(R, D)                        # leading-dim fold -> big-M matmuls

    # ---- merged Q/K/V projections: one (R,D)@(D,D) matmul each (MXU, f32 acc) ----
    q = jnp.dot(x2, wq_ref[0], preferred_element_type=f32).astype(in_dt).reshape(BT, S, D)
    k = jnp.dot(x2, wk_ref[0], preferred_element_type=f32).astype(in_dt).reshape(BT, S, D)
    v = jnp.dot(x2, wv_ref[0], preferred_element_type=f32).astype(in_dt).reshape(BT, S, D)

    # ---- split heads onto a leading (major) batch axis: (H*BT, S, dk) ----
    def heads(t):
        return jnp.concatenate(
            [t[:, :, h * dk:(h + 1) * dk] for h in range(H)], axis=0)

    qh, kh, vh = heads(q), heads(k), heads(v)

    scale = 1.0 / math.sqrt(dk)
    s = jnp.einsum('bqd,bkd->bqk', qh, kh, preferred_element_type=f32) * scale
    s = s - jnp.max(s, axis=-1, keepdims=True)
    p = jnp.exp(s)
    p = p * pl.reciprocal(jnp.sum(p, axis=-1, keepdims=True), approx=True)

    ctx = jnp.einsum('bqk,bkd->bqd', p.astype(in_dt), vh,
                     preferred_element_type=f32)         # (H*BT, S, dk) f32

    # ---- re-pack heads along the lane dim, ONE (R,D)@(D,D) output projection ----
    ctx = jnp.concatenate([ctx[h * BT:(h + 1) * BT] for h in range(H)], axis=-1)
    attn = jnp.dot(ctx.reshape(R, D).astype(in_dt), wo_ref[0],
                   preferred_element_type=f32) + bo_ref[0].astype(f32)

    # residual dropout (eval => identity) + residual + LayerNorm1 (f32 epilogue)
    x1 = _layer_norm(attn + x2.astype(f32),
                     ln1g_ref[0].astype(f32), ln1b_ref[0].astype(f32))

    # ---- FeedForward: big-M matmuls, native-dtype MXU operands, f32 accum ----
    h1 = jnp.dot(x1.astype(in_dt), w1_ref[0],
                 preferred_element_type=f32) + b1_ref[0].astype(f32)
    h1 = jnp.maximum(h1, 0.0)
    h2 = jnp.dot(h1.astype(in_dt), w2_ref[0],
                 preferred_element_type=f32) + b2_ref[0].astype(f32)
    y = _layer_norm(h2 + x1, ln2g_ref[0].astype(f32), ln2b_ref[0].astype(f32))

    o_ref[...] = y.reshape(BT, S, D).astype(o_ref.dtype)


# ---------------- VMEM / tiling heuristics (generation-aware) ----------------
def _physical_vmem_bytes():
    try:
        info = pltpu.get_tpu_info()
        v = getattr(info, "vmem_capacity_bytes", None)
        if v:
            return int(v)
    except Exception:
        pass
    return 64 << 20          # conservative fallback: v7x per-core VMEM


def _activation_working_set(bt, S, D, E, H, itemsize):
    R = bt * S
    tiles = 3 * bt * S * D * itemsize            # x (double-buffered) + resident out
    work = R * (8 * D + 2 * E) * 4               # q/k/v/ctx/attn/x1/h2 + FFN hidden (f32)
    scores = 3 * H * bt * S * S * 4              # s, p, max/sum temporaries (f32)
    return tiles + work + scores


def _pick_batch_tile(B, S, D, E, H, itemsize, phys_vmem, row_target=256):
    budget = (int(phys_vmem * 0.65)) // 2        # activations' share of scoped VMEM
    # keep >= 2 steps on the parallel axis whenever possible (v7x has 2 TCs)
    max_bt = B if B == 1 else B // 2
    best = 1
    for bt in range(1, max_bt + 1):
        if B % bt:
            continue
        if _activation_working_set(bt, S, D, E, H, itemsize) > budget:
            break
        best = bt
        if bt * S >= row_target:                 # enough rows to keep the MXU busy
            break
    return best


def _vmem_limit_bytes(params, bt, S, D, E, H, itemsize, phys_vmem):
    # per-layer weight bytes; double-buffered across the layer grid axis
    # (that double buffer IS the cross-layer prefetch).
    per_layer = sum(int(v.size) // int(v.shape[0]) * v.dtype.itemsize
                    for v in params.values())
    est = (2 * per_layer
           + _activation_working_set(bt, S, D, E, H, itemsize)
           + (4 << 20))
    cap = int(phys_vmem * 0.65)
    return int(min(max(est, 16 << 20), cap))


# ---------------- wrapper ----------------
def encoder_pallas(x, params, num_heads):
    B, S, D = x.shape
    L = params["wq"].shape[0]
    E = params["w1"].shape[-1]
    H = num_heads
    dk = D // H

    phys = _physical_vmem_bytes()
    bt = _pick_batch_tile(B, S, D, E, H, x.dtype.itemsize, phys)
    grid = (B // bt, L)                          # layer axis innermost

    def act_spec():
        return pl.BlockSpec((bt, S, D), lambda i, l: (i, 0, 0))

    def lw(shape):
        n = len(shape)
        return pl.BlockSpec((1,) + shape, lambda i, l, _n=n: (l,) + (0,) * _n)

    in_specs = [
        act_spec(),                                   # x (constant across layer axis)
        lw((D, D)), lw((D, D)), lw((D, D)),           # wq, wk, wv (merged, full D x D)
        lw((D, D)), lw((1, D)),                       # wo, bo
        lw((1, D)), lw((1, D)),                       # ln1 gamma/beta
        lw((D, E)), lw((1, E)),                       # w1, b1
        lw((E, D)), lw((1, D)),                       # w2, b2
        lw((1, D)), lw((1, D)),                       # ln2 gamma/beta
    ]

    kern = partial(encoder_stack_kernel, num_heads=H, dim_k=dk)
    return pl.pallas_call(
        kern,
        out_shape=jax.ShapeDtypeStruct((B, S, D), x.dtype),
        grid_spec=pltpu.PrefetchScalarGridSpec(
            num_scalar_prefetch=0,
            grid=grid,
            in_specs=in_specs,
            out_specs=act_spec(),
        ),
        compiler_params=pltpu.CompilerParams(
            dimension_semantics=("parallel", "arbitrary"),
            vmem_limit_bytes=_vmem_limit_bytes(params, bt, S, D, E, H,
                                               x.dtype.itemsize, phys),
        ),
    )(x, params["wq"], params["wk"], params["wv"], params["wo"], params["bo"],
      params["ln1_g"], params["ln1_b"], params["w1"], params["b1"],
      params["w2"], params["b2"], params["ln2_g"], params["ln2_b"])


# ---------------- pure-JAX reference (same math, exact softmax) ----------------
def encoder_ref(x, p, num_heads):
    L = p["wq"].shape[0]
    D = x.shape[-1]
    dk = D // num_heads
    f32 = jnp.float32
    y = x.astype(f32)
    for l in range(L):
        q = y @ p["wq"][l].astype(f32)
        k = y @ p["wk"][l].astype(f32)
        v = y @ p["wv"][l].astype(f32)

        def split(t):
            return t.reshape(*t.shape[:-1], num_heads, dk)

        s = jnp.einsum('bqhd,bkhd->bhqk', split(q), split(k)) / math.sqrt(dk)
        a = jax.nn.softmax(s, axis=-1)
        ctx = jnp.einsum('bhqk,bkhd->bqhd', a, split(v)).reshape(y.shape)
        attn = ctx @ p["wo"][l].astype(f32) + p["bo"][l][0].astype(f32)
        x1 = _layer_norm(attn + y, p["ln1_g"][l][0].astype(f32),
                         p["ln1_b"][l][0].astype(f32))
        h1 = jnp.maximum(x1 @ p["w1"][l].astype(f32) + p["b1"][l][0].astype(f32), 0.0)
        h2 = h1 @ p["w2"][l].astype(f32) + p["b2"][l][0].astype(f32)
        y = _layer_norm(h2 + x1, p["ln2_g"][l][0].astype(f32),
                        p["ln2_b"][l][0].astype(f32))
    return y.astype(x.dtype)


# ---------------- deterministic parameter init (layer-stacked) ----------------
def init_encoder_params(key, num_blocks, model_dim, expansion_dim, num_heads,
                        dtype=jnp.float32):
    D, E, L = model_dim, expansion_dim, num_blocks
    assert D % num_heads == 0

    def uni(k, shape, fan_in):
        bound = 1.0 / math.sqrt(fan_in)
        return jax.random.uniform(k, shape, jnp.float32, -bound, bound).astype(dtype)

    ks = jax.random.split(key, 9)
    return {
        # merged per-layer projections: head h occupies columns [h*dk:(h+1)*dk]
        "wq": uni(ks[0], (L, D, D), D),
        "wk": uni(ks[1], (L, D, D), D),
        "wv": uni(ks[2], (L, D, D), D),
        "wo": uni(ks[3], (L, D, D), D),
        "bo": uni(ks[4], (L, 1, D), D),
        "ln1_g": jnp.ones((L, 1, D), dtype),
        "ln1_b": jnp.zeros((L, 1, D), dtype),
        "w1": uni(ks[5], (L, D, E), D),
        "b1": uni(ks[6], (L, 1, E), D),
        "w2": uni(ks[7], (L, E, D), E),
        "b2": uni(ks[8], (L, 1, D), E),
        "ln2_g": jnp.ones((L, 1, D), dtype),
        "ln2_b": jnp.zeros((L, 1, D), dtype),
    }


if __name__ == "__main__":
    batch, seq_len, model_dim = 2, 8, 32
    num_heads, expansion_dim, num_blocks = 4, 64, 2

    root = jax.random.PRNGKey(0)
    k_params, k_x = jax.random.split(root)
    params = init_encoder_params(k_params, num_blocks, model_dim, expansion_dim,
                                 num_heads)
    x = jax.random.normal(k_x, (batch, seq_len, model_dim), jnp.float32)

    out = encoder_pallas(x, params, num_heads)
    out = jax.block_until_ready(out)

    ref = jax.block_until_ready(encoder_ref(x, params, num_heads))
    assert out.shape == (batch, seq_len, model_dim)
    # slightly relaxed tolerance: approx EUP reciprocal in the softmax denom
    assert jnp.allclose(out, ref, rtol=5e-3, atol=5e-3), "mismatch vs reference"

    print("KERNEL_OK")
</pallas_src>

<mosaic_0001>
module attributes {stable_mosaic.version = 11 : i64} {
  func.func @encoder_stack_kernel(%arg0: i32, %arg1: i32, %arg2: memref<1x8x32xf32, #tpu.memory_space<vmem>>, %arg3: memref<1x32x32xf32, #tpu.memory_space<vmem>>, %arg4: memref<1x32x32xf32, #tpu.memory_space<vmem>>, %arg5: memref<1x32x32xf32, #tpu.memory_space<vmem>>, %arg6: memref<1x32x32xf32, #tpu.memory_space<vmem>>, %arg7: memref<1x1x32xf32, #tpu.memory_space<vmem>>, %arg8: memref<1x1x32xf32, #tpu.memory_space<vmem>>, %arg9: memref<1x1x32xf32, #tpu.memory_space<vmem>>, %arg10: memref<1x32x64xf32, #tpu.memory_space<vmem>>, %arg11: memref<1x1x64xf32, #tpu.memory_space<vmem>>, %arg12: memref<1x64x32xf32, #tpu.memory_space<vmem>>, %arg13: memref<1x1x32xf32, #tpu.memory_space<vmem>>, %arg14: memref<1x1x32xf32, #tpu.memory_space<vmem>>, %arg15: memref<1x1x32xf32, #tpu.memory_space<vmem>>, %arg16: memref<1x8x32xf32, #tpu.memory_space<vmem>>) attributes {dimension_semantics = [#tpu.dimension_semantics<parallel>, #tpu.dimension_semantics<arbitrary>], iteration_bounds = array<i64: 2, 2>, scalar_prefetch = 0 : i64, scratch_operands = 0 : i64, tpu.core_type = #tpu.core_type<tc>, window_params = [{transform_indices = @transform_0, window_bounds = array<i64: 1, 8, 32>}, {transform_indices = @transform_1, window_bounds = array<i64: 1, 32, 32>}, {transform_indices = @transform_2, window_bounds = array<i64: 1, 32, 32>}, {transform_indices = @transform_3, window_bounds = array<i64: 1, 32, 32>}, {transform_indices = @transform_4, window_bounds = array<i64: 1, 32, 32>}, {transform_indices = @transform_5, window_bounds = array<i64: 1, 1, 32>}, {transform_indices = @transform_6, window_bounds = array<i64: 1, 1, 32>}, {transform_indices = @transform_7, window_bounds = array<i64: 1, 1, 32>}, {transform_indices = @transform_8, window_bounds = array<i64: 1, 32, 64>}, {transform_indices = @transform_9, window_bounds = array<i64: 1, 1, 64>}, {transform_indices = @transform_10, window_bounds = array<i64: 1, 64, 32>}, {transform_indices = @transform_11, window_bounds = array<i64: 1, 1, 32>}, {transform_indices = @transform_12, window_bounds = array<i64: 1, 1, 32>}, {transform_indices = @transform_13, window_bounds = array<i64: 1, 1, 32>}, {transform_indices = @transform_14, window_bounds = array<i64: 1, 8, 32>}]} {
    %c0_i32 = arith.constant 0 : i32
    %0 = arith.cmpi eq, %arg1, %c0_i32 : i32
    %1 = arith.extui %0 : i1 to i32
    %c0_i32_0 = arith.constant 0 : i32
    %2 = arith.cmpi ne, %1, %c0_i32_0 : i32
    scf.if %2 {
      %c0_68 = arith.constant 0 : index
      %c0_69 = arith.constant 0 : index
      %c0_70 = arith.constant 0 : index
      %135 = vector.load %arg2[%c0_68, %c0_69, %c0_70] : memref<1x8x32xf32, #tpu.memory_space<vmem>>, vector<1x8x32xf32>
      %c0_71 = arith.constant 0 : index
      %c0_72 = arith.constant 0 : index
      %c0_73 = arith.constant 0 : index
      %136 = vector.load %arg16[%c0_71, %c0_72, %c0_73] : memref<1x8x32xf32, #tpu.memory_space<vmem>>, vector<1x8x32xf32>
      tpu.vector_store %arg16[%c0_71, %c0_72, %c0_73], %135 {strides = array<i32>} : memref<1x8x32xf32, #tpu.memory_space<vmem>>, vector<1x8x32xf32>,
    } else {
    }
    %c0 = arith.constant 0 : index
    %c0_1 = arith.constant 0 : index
    %c0_2 = arith.constant 0 : index
    %3 = vector.load %arg16[%c0, %c0_1, %c0_2] : memref<1x8x32xf32, #tpu.memory_space<vmem>>, vector<1x8x32xf32>
    %4 = vector.shape_cast %3 : vector<1x8x32xf32> to vector<8x32xf32>
    %c0_3 = arith.constant 0 : index
    %c0_4 = arith.constant 0 : index
    %c0_5 = arith.constant 0 : index
    %5 = vector.load %arg3[%c0_3, %c0_4, %c0_5] : memref<1x32x32xf32, #tpu.memory_space<vmem>>, vector<1x32x32xf32>
    %6 = vector.shape_cast %5 : vector<1x32x32xf32> to vector<32x32xf32>
    %cst = arith.constant dense<0.000000e+00> : vector<8x32xf32>
    %7 = tpu.matmul %4, %6, %cst {dimension_numbers = #tpu.dot_dimension_numbers<[1], [0], [0], [1], [0, 0, 1, 1], [], []>} : vector<8x32xf32>, vector<32x32xf32>, vector<8x32xf32> -> vector<8x32xf32>
    %8 = vector.shape_cast %7 : vector<8x32xf32> to vector<1x8x32xf32>
    %c0_6 = arith.constant 0 : index
    %c0_7 = arith.constant 0 : index
    %c0_8 = arith.constant 0 : index
    %9 = vector.load %arg4[%c0_6, %c0_7, %c0_8] : memref<1x32x32xf32, #tpu.memory_space<vmem>>, vector<1x32x32xf32>
    %10 = vector.shape_cast %9 : vector<1x32x32xf32> to vector<32x32xf32>
    %cst_9 = arith.constant dense<0.000000e+00> : vector<8x32xf32>
    %11 = tpu.matmul %4, %10, %cst_9 {dimension_numbers = #tpu.dot_dimension_numbers<[1], [0], [0], [1], [0, 0, 1, 1], [], []>} : vector<8x32xf32>, vector<32x32xf32>, vector<8x32xf32> -> vector<8x32xf32>
    %12 = vector.shape_cast %11 : vector<8x32xf32> to vector<1x8x32xf32>
    %c0_10 = arith.constant 0 : index
    %c0_11 = arith.constant 0 : index
    %c0_12 = arith.constant 0 : index
    %13 = vector.load %arg5[%c0_10, %c0_11, %c0_12] : memref<1x32x32xf32, #tpu.memory_space<vmem>>, vector<1x32x32xf32>
    %14 = vector.shape_cast %13 : vector<1x32x32xf32> to vector<32x32xf32>
    %cst_13 = arith.constant dense<0.000000e+00> : vector<8x32xf32>
    %15 = tpu.matmul %4, %14, %cst_13 {dimension_numbers = #tpu.dot_dimension_numbers<[1], [0], [0], [1], [0, 0, 1, 1], [], []>} : vector<8x32xf32>, vector<32x32xf32>, vector<8x32xf32> -> vector<8x32xf32>
    %16 = vector.shape_cast %15 : vector<8x32xf32> to vector<1x8x32xf32>
    %17 = vector.extract_strided_slice %8 {offsets = [0, 0, 0], sizes = [1, 8, 8], strides = [1, 1, 1]} : vector<1x8x32xf32> to vector<1x8x8xf32>
    %18 = vector.extract_strided_slice %8 {offsets = [0, 0, 8], sizes = [1, 8, 8], strides = [1, 1, 1]} : vector<1x8x32xf32> to vector<1x8x8xf32>
    %19 = vector.extract_strided_slice %8 {offsets = [0, 0, 16], sizes = [1, 8, 8], strides = [1, 1, 1]} : vector<1x8x32xf32> to vector<1x8x8xf32>
    %20 = vector.extract_strided_slice %8 {offsets = [0, 0, 24], sizes = [1, 8, 8], strides = [1, 1, 1]} : vector<1x8x32xf32> to vector<1x8x8xf32>
    %21 = tpu.concatenate %17, %18, %19, %20 in 0 : vector<1x8x8xf32>, vector<1x8x8xf32>, vector<1x8x8xf32>, vector<1x8x8xf32> -> vector<4x8x8xf32>
    %22 = vector.extract_strided_slice %12 {offsets = [0, 0, 0], sizes = [1, 8, 8], strides = [1, 1, 1]} : vector<1x8x32xf32> to vector<1x8x8xf32>
    %23 = vector.extract_strided_slice %12 {offsets = [0, 0, 8], sizes = [1, 8, 8], strides = [1, 1, 1]} : vector<1x8x32xf32> to vector<1x8x8xf32>
    %24 = vector.extract_strided_slice %12 {offsets = [0, 0, 16], sizes = [1, 8, 8], strides = [1, 1, 1]} : vector<1x8x32xf32> to vector<1x8x8xf32>
    %25 = vector.extract_strided_slice %12 {offsets = [0, 0, 24], sizes = [1, 8, 8], strides = [1, 1, 1]} : vector<1x8x32xf32> to vector<1x8x8xf32>
    %26 = tpu.concatenate %22, %23, %24, %25 in 0 : vector<1x8x8xf32>, vector<1x8x8xf32>, vector<1x8x8xf32>, vector<1x8x8xf32> -> vector<4x8x8xf32>
    %27 = vector.extract_strided_slice %16 {offsets = [0, 0, 0], sizes = [1, 8, 8], strides = [1, 1, 1]} : vector<1x8x32xf32> to vector<1x8x8xf32>
    %28 = vector.extract_strided_slice %16 {offsets = [0, 0, 8], sizes = [1, 8, 8], strides = [1, 1, 1]} : vector<1x8x32xf32> to vector<1x8x8xf32>
    %29 = vector.extract_strided_slice %16 {offsets = [0, 0, 16], sizes = [1, 8, 8], strides = [1, 1, 1]} : vector<1x8x32xf32> to vector<1x8x8xf32>
    %30 = vector.extract_strided_slice %16 {offsets = [0, 0, 24], sizes = [1, 8, 8], strides = [1, 1, 1]} : vector<1x8x32xf32> to vector<1x8x8xf32>
    %31 = tpu.concatenate %27, %28, %29, %30 in 0 : vector<1x8x8xf32>, vector<1x8x8xf32>, vector<1x8x8xf32>, vector<1x8x8xf32> -> vector<4x8x8xf32>
    "tpu.trace_start"() <{level = 10 : i32, message = "bqd,bkd->bqk"}> : () -> ()
    %cst_14 = arith.constant dense<0.000000e+00> : vector<4x8x8xf32>
    %32 = tpu.matmul %21, %26, %cst_14 {dimension_numbers = #tpu.dot_dimension_numbers<[2], [2], [1], [1], [0, 0, 0, 1, 1, 1], [0], [0]>} : vector<4x8x8xf32>, vector<4x8x8xf32>, vector<4x8x8xf32> -> vector<4x8x8xf32>
    "tpu.trace_stop"() : () -> ()
    %cst_15 = arith.constant 0.353553385 : f32
    %33 = vector.broadcast %cst_15 : f32 to vector<4x8x8xf32>
    %34 = arith.mulf %32, %33 : vector<4x8x8xf32>
    %cst_16 = arith.constant dense<0xFF800000> : vector<4x8xf32>
    %35 = vector.multi_reduction <maximumf>, %34, %cst_16 [2] : vector<4x8x8xf32> to vector<4x8xf32>
    %36 = vector.shape_cast %35 : vector<4x8xf32> to vector<4x8x1xf32>
    %37 = vector.broadcast %36 : vector<4x8x1xf32> to vector<4x8x8xf32>
    %38 = arith.subf %34, %37 : vector<4x8x8xf32>
    %39 = math.exp %38 : vector<4x8x8xf32>
    %cst_17 = arith.constant dense<0.000000e+00> : vector<4x8xf32>
    %40 = vector.multi_reduction <add>, %39, %cst_17 [2] : vector<4x8x8xf32> to vector<4x8xf32>
    %41 = vector.shape_cast %40 : vector<4x8xf32> to vector<4x8x1xf32>
    %42 = tpu.reciprocal %41 {approx = true} : vector<4x8x1xf32> -> vector<4x8x1xf32>
    %43 = vector.broadcast %42 : vector<4x8x1xf32> to vector<4x8x8xf32>
    %44 = arith.mulf %39, %43 : vector<4x8x8xf32>
    "tpu.trace_start"() <{level = 10 : i32, message = "bqk,bkd->bqd"}> : () -> ()
    %cst_18 = arith.constant dense<0.000000e+00> : vector<4x8x8xf32>
    %45 = tpu.matmul %44, %31, %cst_18 {dimension_numbers = #tpu.dot_dimension_numbers<[2], [1], [1], [2], [0, 0, 0, 1, 1, 2], [0], [0]>} : vector<4x8x8xf32>, vector<4x8x8xf32>, vector<4x8x8xf32> -> vector<4x8x8xf32>
    "tpu.trace_stop"() : () -> ()
    %46 = vector.extract_strided_slice %45 {offsets = [0, 0, 0], sizes = [1, 8, 8], strides = [1, 1, 1]} : vector<4x8x8xf32> to vector<1x8x8xf32>
    %47 = vector.extract_strided_slice %45 {offsets = [1, 0, 0], sizes = [1, 8, 8], strides = [1, 1, 1]} : vector<4x8x8xf32> to vector<1x8x8xf32>
    %48 = vector.extract_strided_slice %45 {offsets = [2, 0, 0], sizes = [1, 8, 8], strides = [1, 1, 1]} : vector<4x8x8xf32> to vector<1x8x8xf32>
    %49 = vector.extract_strided_slice %45 {offsets = [3, 0, 0], sizes = [1, 8, 8], strides = [1, 1, 1]} : vector<4x8x8xf32> to vector<1x8x8xf32>
    %50 = tpu.concatenate %46, %47, %48, %49 in 2 : vector<1x8x8xf32>, vector<1x8x8xf32>, vector<1x8x8xf32>, vector<1x8x8xf32> -> vector<1x8x32xf32>
    %51 = vector.shape_cast %50 : vector<1x8x32xf32> to vector<8x32xf32>
    %c0_19 = arith.constant 0 : index
    %c0_20 = arith.constant 0 : index
    %c0_21 = arith.constant 0 : index
    %52 = vector.load %arg6[%c0_19, %c0_20, %c0_21] : memref<1x32x32xf32, #tpu.memory_space<vmem>>, vector<1x32x32xf32>
    %53 = vector.shape_cast %52 : vector<1x32x32xf32> to vector<32x32xf32>
    %cst_22 = arith.constant dense<0.000000e+00> : vector<8x32xf32>
    %54 = tpu.matmul %51, %53, %cst_22 {dimension_numbers = #tpu.dot_dimension_numbers<[1], [0], [0], [1], [0, 0, 1, 1], [], []>} : vector<8x32xf32>, vector<32x32xf32>, vector<8x32xf32> -> vector<8x32xf32>
    %c0_23 = arith.constant 0 : index
    %c0_24 = arith.constant 0 : index
    %c0_25 = arith.constant 0 : index
    %55 = vector.load %arg7[%c0_23, %c0_24, %c0_25] : memref<1x1x32xf32, #tpu.memory_space<vmem>>, vector<1x1x32xf32>
    %56 = vector.shape_cast %55 : vector<1x1x32xf32> to vector<1x32xf32>
    %57 = vector.broadcast %56 : vector<1x32xf32> to vector<8x32xf32>
    %58 = arith.addf %54, %57 : vector<8x32xf32>
    %59 = arith.addf %58, %4 : vector<8x32xf32>
    %c0_26 = arith.constant 0 : index
    %c0_27 = arith.constant 0 : index
    %c0_28 = arith.constant 0 : index
    %60 = vector.load %arg8[%c0_26, %c0_27, %c0_28] : memref<1x1x32xf32, #tpu.memory_space<vmem>>, vector<1x1x32xf32>
    %61 = vector.shape_cast %60 : vector<1x1x32xf32> to vector<1x32xf32>
    %c0_29 = arith.constant 0 : index
    %c0_30 = arith.constant 0 : index
    %c0_31 = arith.constant 0 : index
    %62 = vector.load %arg9[%c0_29, %c0_30, %c0_31] : memref<1x1x32xf32, #tpu.memory_space<vmem>>, vector<1x1x32xf32>
    %63 = vector.shape_cast %62 : vector<1x1x32xf32> to vector<1x32xf32>
    %cst_32 = arith.constant dense<0.000000e+00> : vector<8xf32>
    %64 = vector.multi_reduction <add>, %59, %cst_32 [1] : vector<8x32xf32> to vector<8xf32>
    %65 = vector.shape_cast %64 : vector<8xf32> to vector<8x1xf32>
    %cst_33 = arith.constant 3.200000e+01 : f32
    %66 = vector.broadcast %cst_33 : f32 to vector<8x1xf32>
    %67 = arith.divf %65, %66 : vector<8x1xf32>
    %68 = arith.mulf %59, %59 : vector<8x32xf32>
    %cst_34 = arith.constant dense<0.000000e+00> : vector<8xf32>
    %69 = vector.multi_reduction <add>, %68, %cst_34 [1] : vector<8x32xf32> to vector<8xf32>
    %70 = vector.shape_cast %69 : vector<8xf32> to vector<8x1xf32>
    %cst_35 = arith.constant 3.200000e+01 : f32
    %71 = vector.broadcast %cst_35 : f32 to vector<8x1xf32>
    %72 = arith.divf %70, %71 : vector<8x1xf32>
    %73 = arith.mulf %67, %67 : vector<8x1xf32>
    %74 = arith.subf %72, %73 : vector<8x1xf32>
    %cst_36 = arith.constant 0.000000e+00 : f32
    %75 = vector.broadcast %cst_36 : f32 to vector<8x1xf32>
    %76 = arith.maximumf %74, %75 : vector<8x1xf32>
    %77 = vector.broadcast %67 : vector<8x1xf32> to vector<8x32xf32>
    %78 = arith.subf %59, %77 : vector<8x32xf32>
    %cst_37 = arith.constant 9.99999974E-6 : f32
    %79 = vector.broadcast %cst_37 : f32 to vector<8x1xf32>
    %80 = arith.addf %76, %79 : vector<8x1xf32>
    %81 = math.rsqrt %80 : vector<8x1xf32>
    %82 = vector.broadcast %81 : vector<8x1xf32> to vector<8x32xf32>
    %83 = arith.mulf %78, %82 : vector<8x32xf32>
    %84 = vector.broadcast %61 : vector<1x32xf32> to vector<8x32xf32>
    %85 = arith.mulf %83, %84 : vector<8x32xf32>
    %86 = vector.broadcast %63 : vector<1x32xf32> to vector<8x32xf32>
    %87 = arith.addf %85, %86 : vector<8x32xf32>
    %c0_38 = arith.constant 0 : index
    %c0_39 = arith.constant 0 : index
    %c0_40 = arith.constant 0 : index
    %88 = vector.load %arg10[%c0_38, %c0_39, %c0_40] : memref<1x32x64xf32, #tpu.memory_space<vmem>>, vector<1x32x64xf32>
    %89 = vector.shape_cast %88 : vector<1x32x64xf32> to vector<32x64xf32>
    %cst_41 = arith.constant dense<0.000000e+00> : vector<8x64xf32>
    %90 = tpu.matmul %87, %89, %cst_41 {dimension_numbers = #tpu.dot_dimension_numbers<[1], [0], [0], [1], [0, 0, 1, 1], [], []>} : vector<8x32xf32>, vector<32x64xf32>, vector<8x64xf32> -> vector<8x64xf32>
    %c0_42 = arith.constant 0 : index
    %c0_43 = arith.constant 0 : index
    %c0_44 = arith.constant 0 : index
    %91 = vector.load %arg11[%c0_42, %c0_43, %c0_44] : memref<1x1x64xf32, #tpu.memory_space<vmem>>, vector<1x1x64xf32>
    %92 = vector.shape_cast %91 : vector<1x1x64xf32> to vector<1x64xf32>
    %93 = vector.broadcast %92 : vector<1x64xf32> to vector<8x64xf32>
    %94 = arith.addf %90, %93 : vector<8x64xf32>
    %cst_45 = arith.constant 0.000000e+00 : f32
    %95 = vector.broadcast %cst_45 : f32 to vector<8x64xf32>
    %96 = arith.maximumf %94, %95 : vector<8x64xf32>
    %c0_46 = arith.constant 0 : index
    %c0_47 = arith.constant 0 : index
    %c0_48 = arith.constant 0 : index
    %97 = vector.load %arg12[%c0_46, %c0_47, %c0_48] : memref<1x64x32xf32, #tpu.memory_space<vmem>>, vector<1x64x32xf32>
    %98 = vector.shape_cast %97 : vector<1x64x32xf32> to vector<64x32xf32>
    %cst_49 = arith.constant dense<0.000000e+00> : vector<8x32xf32>
    %99 = tpu.matmul %96, %98, %cst_49 {dimension_numbers = #tpu.dot_dimension_numbers<[1], [0], [0], [1], [0, 0, 1, 1], [], []>} : vector<8x64xf32>, vector<64x32xf32>, vector<8x32xf32> -> vector<8x32xf32>
    %c0_50 = arith.constant 0 : index
    %c0_51 = arith.constant 0 : index
    %c0_52 = arith.constant 0 : index
    %100 = vector.load %arg13[%c0_50, %c0_51, %c0_52] : memref<1x1x32xf32, #tpu.memory_space<vmem>>, vector<1x1x32xf32>
    %101 = vector.shape_cast %100 : vector<1x1x32xf32> to vector<1x32xf32>
    %102 = vector.broadcast %101 : vector<1x32xf32> to vector<8x32xf32>
    %103 = arith.addf %99, %102 : vector<8x32xf32>
    %104 = arith.addf %103, %87 : vector<8x32xf32>
    %c0_53 = arith.constant 0 : index
    %c0_54 = arith.constant 0 : index
    %c0_55 = arith.constant 0 : index
    %105 = vector.load %arg14[%c0_53, %c0_54, %c0_55] : memref<1x1x32xf32, #tpu.memory_space<vmem>>, vector<1x1x32xf32>
    %106 = vector.shape_cast %105 : vector<1x1x32xf32> to vector<1x32xf32>
    %c0_56 = arith.constant 0 : index
    %c0_57 = arith.constant 0 : index
    %c0_58 = arith.constant 0 : index
    %107 = vector.load %arg15[%c0_56, %c0_57, %c0_58] : memref<1x1x32xf32, #tpu.memory_space<vmem>>, vector<1x1x32xf32>
    %108 = vector.shape_cast %107 : vector<1x1x32xf32> to vector<1x32xf32>
    %cst_59 = arith.constant dense<0.000000e+00> : vector<8xf32>
    %109 = vector.multi_reduction <add>, %104, %cst_59 [1] : vector<8x32xf32> to vector<8xf32>
    %110 = vector.shape_cast %109 : vector<8xf32> to vector<8x1xf32>
    %cst_60 = arith.constant 3.200000e+01 : f32
    %111 = vector.broadcast %cst_60 : f32 to vector<8x1xf32>
    %112 = arith.divf %110, %111 : vector<8x1xf32>
    %113 = arith.mulf %104, %104 : vector<8x32xf32>
    %cst_61 = arith.constant dense<0.000000e+00> : vector<8xf32>
    %114 = vector.multi_reduction <add>, %113, %cst_61 [1] : vector<8x32xf32> to vector<8xf32>
    %115 = vector.shape_cast %114 : vector<8xf32> to vector<8x1xf32>
    %cst_62 = arith.constant 3.200000e+01 : f32
    %116 = vector.broadcast %cst_62 : f32 to vector<8x1xf32>
    %117 = arith.divf %115, %116 : vector<8x1xf32>
    %118 = arith.mulf %112, %112 : vector<8x1xf32>
    %119 = arith.subf %117, %118 : vector<8x1xf32>
    %cst_63 = arith.constant 0.000000e+00 : f32
    %120 = vector.broadcast %cst_63 : f32 to vector<8x1xf32>
    %121 = arith.maximumf %119, %120 : vector<8x1xf32>
    %122 = vector.broadcast %112 : vector<8x1xf32> to vector<8x32xf32>
    %123 = arith.subf %104, %122 : vector<8x32xf32>
    %cst_64 = arith.constant 9.99999974E-6 : f32
    %124 = vector.broadcast %cst_64 : f32 to vector<8x1xf32>
    %125 = arith.addf %121, %124 : vector<8x1xf32>
    %126 = math.rsqrt %125 : vector<8x1xf32>
    %127 = vector.broadcast %126 : vector<8x1xf32> to vector<8x32xf32>
    %128 = arith.mulf %123, %127 : vector<8x32xf32>
    %129 = vector.broadcast %106 : vector<1x32xf32> to vector<8x32xf32>
    %130 = arith.mulf %128, %129 : vector<8x32xf32>
    %131 = vector.broadcast %108 : vector<1x32xf32> to vector<8x32xf32>
    %132 = arith.addf %130, %131 : vector<8x32xf32>
    %133 = vector.shape_cast %132 : vector<8x32xf32> to vector<1x8x32xf32>
    %c0_65 = arith.constant 0 : index
    %c0_66 = arith.constant 0 : index
    %c0_67 = arith.constant 0 : index
    %134 = vector.load %arg16[%c0_65, %c0_66, %c0_67] : memref<1x8x32xf32, #tpu.memory_space<vmem>>, vector<1x8x32xf32>
    tpu.vector_store %arg16[%c0_65, %c0_66, %c0_67], %133 {strides = array<i32>} : memref<1x8x32xf32, #tpu.memory_space<vmem>>, vector<1x8x32xf32>,
    return
  }
  func.func @transform_0(%arg0: i32, %arg1: i32) -> (i32, i32, i32) {
    %c0_i32 = arith.constant 0 : i32
    %c0_i32_0 = arith.constant 0 : i32
    %c0_i32_1 = arith.constant 0 : i32
    return %arg0, %c0_i32, %c0_i32_0 : i32, i32, i32
  }
  func.func @transform_1(%arg0: i32, %arg1: i32) -> (i32, i32, i32) {
    %c0_i32 = arith.constant 0 : i32
    %c0_i32_0 = arith.constant 0 : i32
    %c0_i32_1 = arith.constant 0 : i32
    return %arg1, %c0_i32, %c0_i32_0 : i32, i32, i32
  }
  func.func @transform_2(%arg0: i32, %arg1: i32) -> (i32, i32, i32) {
    %c0_i32 = arith.constant 0 : i32
    %c0_i32_0 = arith.constant 0 : i32
    %c0_i32_1 = arith.constant 0 : i32
    return %arg1, %c0_i32, %c0_i32_0 : i32, i32, i32
  }
  func.func @transform_3(%arg0: i32, %arg1: i32) -> (i32, i32, i32) {
    %c0_i32 = arith.constant 0 : i32
    %c0_i32_0 = arith.constant 0 : i32
    %c0_i32_1 = arith.constant 0 : i32
    return %arg1, %c0_i32, %c0_i32_0 : i32, i32, i32
  }
  func.func @transform_4(%arg0: i32, %arg1: i32) -> (i32, i32, i32) {
    %c0_i32 = arith.constant 0 : i32
    %c0_i32_0 = arith.constant 0 : i32
    %c0_i32_1 = arith.constant 0 : i32
    return %arg1, %c0_i32, %c0_i32_0 : i32, i32, i32
  }
  func.func @transform_5(%arg0: i32, %arg1: i32) -> (i32, i32, i32) {
    %c0_i32 = arith.constant 0 : i32
    %c0_i32_0 = arith.constant 0 : i32
    %c0_i32_1 = arith.constant 0 : i32
    return %arg1, %c0_i32, %c0_i32_0 : i32, i32, i32
  }
  func.func @transform_6(%arg0: i32, %arg1: i32) -> (i32, i32, i32) {
    %c0_i32 = arith.constant 0 : i32
    %c0_i32_0 = arith.constant 0 : i32
    %c0_i32_1 = arith.constant 0 : i32
    return %arg1, %c0_i32, %c0_i32_0 : i32, i32, i32
  }
  func.func @transform_7(%arg0: i32, %arg1: i32) -> (i32, i32, i32) {
    %c0_i32 = arith.constant 0 : i32
    %c0_i32_0 = arith.constant 0 : i32
    %c0_i32_1 = arith.constant 0 : i32
    return %arg1, %c0_i32, %c0_i32_0 : i32, i32, i32
  }
  func.func @transform_8(%arg0: i32, %arg1: i32) -> (i32, i32, i32) {
    %c0_i32 = arith.constant 0 : i32
    %c0_i32_0 = arith.constant 0 : i32
    %c0_i32_1 = arith.constant 0 : i32
    return %arg1, %c0_i32, %c0_i32_0 : i32, i32, i32
  }
  func.func @transform_9(%arg0: i32, %arg1: i32) -> (i32, i32, i32) {
    %c0_i32 = arith.constant 0 : i32
    %c0_i32_0 = arith.constant 0 : i32
    %c0_i32_1 = arith.constant 0 : i32
    return %arg1, %c0_i32, %c0_i32_0 : i32, i32, i32
  }
  func.func @transform_10(%arg0: i32, %arg1: i32) -> (i32, i32, i32) {
    %c0_i32 = arith.constant 0 : i32
    %c0_i32_0 = arith.constant 0 : i32
    %c0_i32_1 = arith.constant 0 : i32
    return %arg1, %c0_i32, %c0_i32_0 : i32, i32, i32
  }
  func.func @transform_11(%arg0: i32, %arg1: i32) -> (i32, i32, i32) {
    %c0_i32 = arith.constant 0 : i32
    %c0_i32_0 = arith.constant 0 : i32
    %c0_i32_1 = arith.constant 0 : i32
    return %arg1, %c0_i32, %c0_i32_0 : i32, i32, i32
  }
  func.func @transform_12(%arg0: i32, %arg1: i32) -> (i32, i32, i32) {
    %c0_i32 = arith.constant 0 : i32
    %c0_i32_0 = arith.constant 0 : i32
    %c0_i32_1 = arith.constant 0 : i32
    return %arg1, %c0_i32, %c0_i32_0 : i32, i32, i32
  }
  func.func @transform_13(%arg0: i32, %arg1: i32) -> (i32, i32, i32) {
    %c0_i32 = arith.constant 0 : i32
    %c0_i32_0 = arith.constant 0 : i32
    %c0_i32_1 = arith.constant 0 : i32
    return %arg1, %c0_i32, %c0_i32_0 : i32, i32, i32
  }
  func.func @transform_14(%arg0: i32, %arg1: i32) -> (i32, i32, i32) {
    %c0_i32 = arith.constant 0 : i32
    %c0_i32_0 = arith.constant 0 : i32
    %c0_i32_1 = arith.constant 0 : i32
    return %arg0, %c0_i32, %c0_i32_0 : i32, i32, i32
  }
}

</mosaic_0001>

<llo_original>
// kernel: tpu_custom_call.1
$region0: #{tpu_custom_call.1}
  #allocation0 [shape = 'u32[]', space=smem, size = 0x4, offset = 0x4, fixed_abs, tag = 'smem constant byte address 0x4 - core index']
  #allocation1 [shape = 'u32[72,128]{1,0:T(1,128)}', space=vmem, size = 0x9000, scoped, tag = 'internal scratch']
  %s0 = inlined_call_operand.hbm [shape: f32[2,8,32], index: 0, kind: input, shape index: {}]
  %s1 = inlined_call_operand.vmem [shape: f32[2,32,32], index: 1, kind: input, shape index: {}]
  %s2 = inlined_call_operand.vmem [shape: f32[2,32,32], index: 2, kind: input, shape index: {}]
  %s3 = inlined_call_operand.vmem [shape: f32[2,32,32], index: 3, kind: input, shape index: {}]
  %s4 = inlined_call_operand.hbm [shape: f32[2,32,32], index: 4, kind: input, shape index: {}]
  %s5 = inlined_call_operand.vmem [shape: f32[2,1,32], index: 5, kind: input, shape index: {}]
  %s6 = inlined_call_operand.vmem [shape: f32[2,1,32], index: 6, kind: input, shape index: {}]
  %s7 = inlined_call_operand.hbm [shape: f32[2,1,32], index: 7, kind: input, shape index: {}]
  %s8 = inlined_call_operand.hbm [shape: f32[2,32,64], index: 8, kind: input, shape index: {}]
  %s9 = inlined_call_operand.vmem [shape: f32[2,1,64], index: 9, kind: input, shape index: {}]
  %s10 = inlined_call_operand.vmem [shape: f32[2,64,32], index: 10, kind: input, shape index: {}]
  %s11 = inlined_call_operand.vmem [shape: f32[2,1,32], index: 11, kind: input, shape index: {}]
  %s12 = inlined_call_operand.vmem [shape: f32[2,1,32], index: 12, kind: input, shape index: {}]
  %s13 = inlined_call_operand.hbm [shape: f32[2,1,32], index: 13, kind: input, shape index: {}]
  %s14 = inlined_call_operand.hbm [shape: f32[2,8,32], index: 14, kind: output, shape index: {}]
  %s15 = sld [smem:[#allocation0]]
  $region113: #{tpu_custom_call.1} parent=0
    _
  %s17 = ssub.s32 1, %s15
  %s18 = scalar_select 0, %s17, %s15
  $region1: #{tpu_custom_call.1} parent=0
    #allocation2 [shape = 'u8[8192]{0}', space=vmem, size = 0x2000, scoped, tag = 'input window, operand 0']
    #allocation3 [shape = 's32[2]{0}', space=sflag, size = 0x8, scoped, tag = 'scoped memory for tpu_custom_call.1']
    #allocation4 [shape = 's32[2]{0}', space=sflag, size = 0x8, scoped, tag = 'scoped memory for tpu_custom_call.1']
    #allocation5 [shape = 'u8[32768]{0}', space=vmem, size = 0x8000, scoped, tag = 'input window, operand 4']
    #allocation6 [shape = 's32[2]{0}', space=sflag, size = 0x8, scoped, tag = 'scoped memory for tpu_custom_call.1']
    #allocation7 [shape = 'u8[1024]{0}', space=vmem, size = 0x400, scoped, tag = 'input window, operand 7']
    #allocation8 [shape = 'u8[32768]{0}', space=vmem, size = 0x8000, scoped, tag = 'input window, operand 8']
    #allocation9 [shape = 's32[2]{0}', space=sflag, size = 0x8, scoped, tag = 'scoped memory for tpu_custom_call.1']
    #allocation10 [shape = 'u8[1024]{0}', space=vmem, size = 0x400, scoped, tag = 'input window, operand 13']
    #allocation11 [shape = 'u8[8192]{0}', space=vmem, size = 0x2000, scoped, tag = 'output window, operand 0']
    %19 = vsyncpa [#allocation3], 0
    %s20 = scalar_lea.sflag [#allocation3], 1
    %21 = vsyncpa %s20, 0
    %22 = vsyncpa [#allocation6], 0
    %s23 = scalar_lea.sflag [#allocation6], 1
    %24 = vsyncpa %s23, 0
    %25 = vsyncpa [#allocation9], 0
    %s26 = scalar_lea.sflag [#allocation9], 1
    %27 = vsyncpa %s26, 0
    %28 = vsyncpa [#allocation4], 0
    %s29 = scalar_lea.sflag [#allocation4], 1
    %30 = vsyncpa %s29, 0
    loop: start=0, step=1, limit=6
    $region2: #{tpu_custom_call.1} parent=1 // loop_pre_header
      _
    $region3: #{tpu_custom_call.1} parent=1 // loop_header
      %s32 = sphi 0, %s36
      %p33 = scmp.ge.s32.totalorder %s32, 6
      %s39 = sphi 0, %s51
      %s40 = sphi 0, %s47
      %s41 = sphi 0, %s39
      %s42 = sphi 0, %s40
      %s43 = sphi 0, %s41
      %s44 = sphi 0, %s42
      %s54 = sphi 0, %s56
      %s57 = sphi 0, %s54
      %s58 = sphi 0, %s57
      %s74 = sphi 0, %s58
      %s80 = sphi 0, %s82
      %s83 = sphi 0, %s80
      %s84 = sphi 0, %s83
      %s100 = sphi 0, %s84
      %s106 = sphi 0, %s108
      %s109 = sphi 0, %s106
      %s110 = sphi 0, %s109
      %s126 = sphi 0, %s110
      %s132 = sphi 0, %s134
      %s135 = sphi 0, %s132
      %s136 = sphi 0, %s135
      %s152 = sphi 0, %s136
      %s158 = sphi 0, %s160
      %s161 = sphi 0, %s158
      %s162 = sphi 0, %s161
      %s178 = sphi 0, %s162
      %s184 = sphi 0, %s186
      %s187 = sphi 0, %s184
      %s188 = sphi 0, %s187
      %s204 = sphi 0, %s188
      %s210 = sphi 0, %s212
      %s213 = sphi 0, %s210
      %s214 = sphi 0, %s213
      %s230 = sphi 0, %s214
      %s236 = sphi 0, %s238
      %s239 = sphi 0, %s236
      %s240 = sphi 0, %s239
      %s256 = sphi 0, %s240
      %s262 = sphi 0, %s264
      %s265 = sphi 0, %s262
      %s266 = sphi 0, %s265
      %s282 = sphi 0, %s266
      %s288 = sphi 0, %s290
      %s291 = sphi 0, %s288
      %s292 = sphi 0, %s291
      %s308 = sphi 0, %s292
      %s314 = sphi 0, %s316
      %s317 = sphi 0, %s314
      %s318 = sphi 0, %s317
      %s334 = sphi 0, %s318
      %s340 = sphi 0, %s342
      %s343 = sphi 0, %s340
      %s344 = sphi 0, %s343
      %s360 = sphi 0, %s344
      %s366 = sphi 0, %s368
      %s369 = sphi 0, %s366
      %s370 = sphi 0, %s369
      %s386 = sphi 0, %s370
      %s392 = sphi 0, %s394
      %s395 = sphi 0, %s392
      %s396 = sphi 0, %s395
      %s412 = sphi 0, %s396
      %s418 = sphi 0, %s420
      %s421 = sphi 0, %s418
      %s422 = sphi 0, %s421
      %s438 = sphi 0, %s422
    $region4: #{tpu_custom_call.1} parent=1 // loop_header_branch
      %35 = sbr.rel (%p33) target = $region8
    $region5: #{tpu_custom_call.1} parent=1 // loop_body
      %s37 = ssub.s32 %s32, 1
      %s38 = ssub.s32 %s32, 2
      %s45 = sadd.s32 1, %s40
      %p46 = scmp.ge.s32.totalorder %s45, 2
      %s47 = scalar_select %p46, 0, %s45
      %s48 = sadd.s32 1, %s39
      %s49 = scalar_select %p46, %s48, %s39
      %p50 = scmp.ge.s32.totalorder %s49, 2
      %s51 = scalar_select %p50, 0, %s49
      %s52 = ssub.s32 %s39, %s51
      %p53 = scmp.eq.s32.totalorder %s52, 0
      %s55 = sadd.s32 %s54, 1
      %s56 = scalar_select %p53, %s54, %s55
      %p59 = pneg %p53
      %p60 = scmp.eq.s32.totalorder %s32, 3
      %p61 = por %p59, %p60
      %p62 = scmp.ne.s32.totalorder %s54, %s57
      %p63 = scmp.eq.s32.totalorder %s32, 0
      %p64 = por %p62, %p63
      %p65 = scmp.ne.s32.totalorder %s54, %s57
      %p66 = scmp.eq.s32.totalorder %s37, 3
      %p67 = por %p65, %p66
      %p68 = scmp.ne.s32.totalorder %s57, %s58
      %p69 = scmp.eq.s32.totalorder %s37, 0
      %p70 = por %p68, %p69
      %p71 = scmp.ne.s32.totalorder %s57, %s58
      %p72 = scmp.eq.s32.totalorder %s38, 3
      %p73 = por %p71, %p72
      %p75 = scmp.ne.s32.totalorder %s58, %s74
      %p76 = scmp.eq.s32.totalorder %s38, 0
      %p77 = por %p75, %p76
      %s78 = ssub.s32 %s40, %s47
      %p79 = scmp.eq.s32.totalorder %s78, 0
      %s81 = sadd.s32 %s80, 1
      %s82 = scalar_select %p79, %s80, %s81
      %p85 = pneg %p79
      %p86 = scmp.eq.s32.totalorder %s32, 3
      %p87 = por %p85, %p86
      %p88 = scmp.ne.s32.totalorder %s80, %s83
      %p89 = scmp.eq.s32.totalorder %s32, 0
      %p90 = por %p88, %p89
      %p91 = scmp.ne.s32.totalorder %s80, %s83
      %p92 = scmp.eq.s32.totalorder %s37, 3
      %p93 = por %p91, %p92
      %p94 = scmp.ne.s32.totalorder %s83, %s84
      %p95 = scmp.eq.s32.totalorder %s37, 0
      %p96 = por %p94, %p95
      %p97 = scmp.ne.s32.totalorder %s83, %s84
      %p98 = scmp.eq.s32.totalorder %s38, 3
      %p99 = por %p97, %p98
      %p101 = scmp.ne.s32.totalorder %s84, %s100
      %p102 = scmp.eq.s32.totalorder %s38, 0
      %p103 = por %p101, %p102
      %s104 = ssub.s32 %s40, %s47
      %p105 = scmp.eq.s32.totalorder %s104, 0
      %s107 = sadd.s32 %s106, 1
      %s108 = scalar_select %p105, %s106, %s107
      %p111 = pneg %p105
      %p112 = scmp.eq.s32.totalorder %s32, 3
      %p113 = por %p111, %p112
      %p114 = scmp.ne.s32.totalorder %s106, %s109
      %p115 = scmp.eq.s32.totalorder %s32, 0
      %p116 = por %p114, %p115
      %p117 = scmp.ne.s32.totalorder %s106, %s109
      %p118 = scmp.eq.s32.totalorder %s37, 3
      %p119 = por %p117, %p118
      %p120 = scmp.ne.s32.totalorder %s109, %s110
      %p121 = scmp.eq.s32.totalorder %s37, 0
      %p122 = por %p120, %p121
      %p123 = scmp.ne.s32.totalorder %s109, %s110
      %p124 = scmp.eq.s32.totalorder %s38, 3
      %p125 = por %p123, %p124
      %p127 = scmp.ne.s32.totalorder %s110, %s126
      %p128 = scmp.eq.s32.totalorder %s38, 0
      %p129 = por %p127, %p128
      %s130 = ssub.s32 %s40, %s47
      %p131 = scmp.eq.s32.totalorder %s130, 0
      %s133 = sadd.s32 %s132, 1
      %s134 = scalar_select %p131, %s132, %s133
      %p137 = pneg %p131
      %p138 = scmp.eq.s32.totalorder %s32, 3
      %p139 = por %p137, %p138
      %p140 = scmp.ne.s32.totalorder %s132, %s135
      %p141 = scmp.eq.s32.totalorder %s32, 0
      %p142 = por %p140, %p141
      %p143 = scmp.ne.s32.totalorder %s132, %s135
      %p144 = scmp.eq.s32.totalorder %s37, 3
      %p145 = por %p143, %p144
      %p146 = scmp.ne.s32.totalorder %s135, %s136
      %p147 = scmp.eq.s32.totalorder %s37, 0
      %p148 = por %p146, %p147
      %p149 = scmp.ne.s32.totalorder %s135, %s136
      %p150 = scmp.eq.s32.totalorder %s38, 3
      %p151 = por %p149, %p150
      %p153 = scmp.ne.s32.totalorder %s136, %s152
      %p154 = scmp.eq.s32.totalorder %s38, 0
      %p155 = por %p153, %p154
      %s156 = ssub.s32 %s40, %s47
      %p157 = scmp.eq.s32.totalorder %s156, 0
      %s159 = sadd.s32 %s158, 1
      %s160 = scalar_select %p157, %s158, %s159
      %p163 = pneg %p157
      %p164 = scmp.eq.s32.totalorder %s32, 3
      %p165 = por %p163, %p164
      %p166 = scmp.ne.s32.totalorder %s158, %s161
      %p167 = scmp.eq.s32.totalorder %s32, 0
      %p168 = por %p166, %p167
      %p169 = scmp.ne.s32.totalorder %s158, %s161
      %p170 = scmp.eq.s32.totalorder %s37, 3
      %p171 = por %p169, %p170
      %p172 = scmp.ne.s32.totalorder %s161, %s162
      %p173 = scmp.eq.s32.totalorder %s37, 0
      %p174 = por %p172, %p173
      %p175 = scmp.ne.s32.totalorder %s161, %s162
      %p176 = scmp.eq.s32.totalorder %s38, 3
      %p177 = por %p175, %p176
      %p179 = scmp.ne.s32.totalorder %s162, %s178
      %p180 = scmp.eq.s32.totalorder %s38, 0
      %p181 = por %p179, %p180
      %s182 = ssub.s32 %s40, %s47
      %p183 = scmp.eq.s32.totalorder %s182, 0
      %s185 = sadd.s32 %s184, 1
      %s186 = scalar_select %p183, %s184, %s185
      %p189 = pneg %p183
      %p190 = scmp.eq.s32.totalorder %s32, 3
      %p191 = por %p189, %p190
      %p192 = scmp.ne.s32.totalorder %s184, %s187
      %p193 = scmp.eq.s32.totalorder %s32, 0
      %p194 = por %p192, %p193
      %p195 = scmp.ne.s32.totalorder %s184, %s187
      %p196 = scmp.eq.s32.totalorder %s37, 3
      %p197 = por %p195, %p196
      %p198 = scmp.ne.s32.totalorder %s187, %s188
      %p199 = scmp.eq.s32.totalorder %s37, 0
      %p200 = por %p198, %p199
      %p201 = scmp.ne.s32.totalorder %s187, %s188
      %p202 = scmp.eq.s32.totalorder %s38, 3
      %p203 = por %p201, %p202
      %p205 = scmp.ne.s32.totalorder %s188, %s204
      %p206 = scmp.eq.s32.totalorder %s38, 0
      %p207 = por %p205, %p206
      %s208 = ssub.s32 %s40, %s47
      %p209 = scmp.eq.s32.totalorder %s208, 0
      %s211 = sadd.s32 %s210, 1
      %s212 = scalar_select %p209, %s210, %s211
      %p215 = pneg %p209
      %p216 = scmp.eq.s32.totalorder %s32, 3
      %p217 = por %p215, %p216
      %p218 = scmp.ne.s32.totalorder %s210, %s213
      %p219 = scmp.eq.s32.totalorder %s32, 0
      %p220 = por %p218, %p219
      %p221 = scmp.ne.s32.totalorder %s210, %s213
      %p222 = scmp.eq.s32.totalorder %s37, 3
      %p223 = por %p221, %p222
      %p224 = scmp.ne.s32.totalorder %s213, %s214
      %p225 = scmp.eq.s32.totalorder %s37, 0
      %p226 = por %p224, %p225
      %p227 = scmp.ne.s32.totalorder %s213, %s214
      %p228 = scmp.eq.s32.totalorder %s38, 3
      %p229 = por %p227, %p228
      %p231 = scmp.ne.s32.totalorder %s214, %s230
      %p232 = scmp.eq.s32.totalorder %s38, 0
      %p233 = por %p231, %p232
      %s234 = ssub.s32 %s40, %s47
      %p235 = scmp.eq.s32.totalorder %s234, 0
      %s237 = sadd.s32 %s236, 1
      %s238 = scalar_select %p235, %s236, %s237
      %p241 = pneg %p235
      %p242 = scmp.eq.s32.totalorder %s32, 3
      %p243 = por %p241, %p242
      %p244 = scmp.ne.s32.totalorder %s236, %s239
      %p245 = scmp.eq.s32.totalorder %s32, 0
      %p246 = por %p244, %p245
      %p247 = scmp.ne.s32.totalorder %s236, %s239
      %p248 = scmp.eq.s32.totalorder %s37, 3
      %p249 = por %p247, %p248
      %p250 = scmp.ne.s32.totalorder %s239, %s240
      %p251 = scmp.eq.s32.totalorder %s37, 0
      %p252 = por %p250, %p251
      %p253 = scmp.ne.s32.totalorder %s239, %s240
      %p254 = scmp.eq.s32.totalorder %s38, 3
      %p255 = por %p253, %p254
      %p257 = scmp.ne.s32.totalorder %s240, %s256
      %p258 = scmp.eq.s32.totalorder %s38, 0
      %p259 = por %p257, %p258
      %s260 = ssub.s32 %s40, %s47
      %p261 = scmp.eq.s32.totalorder %s260, 0
      %s263 = sadd.s32 %s262, 1
      %s264 = scalar_select %p261, %s262, %s263
      %p267 = pneg %p261
      %p268 = scmp.eq.s32.totalorder %s32, 3
      %p269 = por %p267, %p268
      %p270 = scmp.ne.s32.totalorder %s262, %s265
      %p271 = scmp.eq.s32.totalorder %s32, 0
      %p272 = por %p270, %p271
      %p273 = scmp.ne.s32.totalorder %s262, %s265
      %p274 = scmp.eq.s32.totalorder %s37, 3
      %p275 = por %p273, %p274
      %p276 = scmp.ne.s32.totalorder %s265, %s266
      %p277 = scmp.eq.s32.totalorder %s37, 0
      %p278 = por %p276, %p277
      %p279 = scmp.ne.s32.totalorder %s265, %s266
      %p280 = scmp.eq.s32.totalorder %s38, 3
      %p281 = por %p279, %p280
      %p283 = scmp.ne.s32.totalorder %s266, %s282
      %p284 = scmp.eq.s32.totalorder %s38, 0
      %p285 = por %p283, %p284
      %s286 = ssub.s32 %s40, %s47
      %p287 = scmp.eq.s32.totalorder %s286, 0
      %s289 = sadd.s32 %s288, 1
      %s290 = scalar_select %p287, %s288, %s289
      %p293 = pneg %p287
      %p294 = scmp.eq.s32.totalorder %s32, 3
      %p295 = por %p293, %p294
      %p296 = scmp.ne.s32.totalorder %s288, %s291
      %p297 = scmp.eq.s32.totalorder %s32, 0
      %p298 = por %p296, %p297
      %p299 = scmp.ne.s32.totalorder %s288, %s291
      %p300 = scmp.eq.s32.totalorder %s37, 3
      %p301 = por %p299, %p300
      %p302 = scmp.ne.s32.totalorder %s291, %s292
      %p303 = scmp.eq.s32.totalorder %s37, 0
      %p304 = por %p302, %p303
      %p305 = scmp.ne.s32.totalorder %s291, %s292
      %p306 = scmp.eq.s32.totalorder %s38, 3
      %p307 = por %p305, %p306
      %p309 = scmp.ne.s32.totalorder %s292, %s308
      %p310 = scmp.eq.s32.totalorder %s38, 0
      %p311 = por %p309, %p310
      %s312 = ssub.s32 %s40, %s47
      %p313 = scmp.eq.s32.totalorder %s312, 0
      %s315 = sadd.s32 %s314, 1
      %s316 = scalar_select %p313, %s314, %s315
      %p319 = pneg %p313
      %p320 = scmp.eq.s32.totalorder %s32, 3
      %p321 = por %p319, %p320
      %p322 = scmp.ne.s32.totalorder %s314, %s317
      %p323 = scmp.eq.s32.totalorder %s32, 0
      %p324 = por %p322, %p323
      %p325 = scmp.ne.s32.totalorder %s314, %s317
      %p326 = scmp.eq.s32.totalorder %s37, 3
      %p327 = por %p325, %p326
      %p328 = scmp.ne.s32.totalorder %s317, %s318
      %p329 = scmp.eq.s32.totalorder %s37, 0
      %p330 = por %p328, %p329
      %p331 = scmp.ne.s32.totalorder %s317, %s318
      %p332 = scmp.eq.s32.totalorder %s38, 3
      %p333 = por %p331, %p332
      %p335 = scmp.ne.s32.totalorder %s318, %s334
      %p336 = scmp.eq.s32.totalorder %s38, 0
      %p337 = por %p335, %p336
      %s338 = ssub.s32 %s40, %s47
      %p339 = scmp.eq.s32.totalorder %s338, 0
      %s341 = sadd.s32 %s340, 1
      %s342 = scalar_select %p339, %s340, %s341
      %p345 = pneg %p339
      %p346 = scmp.eq.s32.totalorder %s32, 3
      %p347 = por %p345, %p346
      %p348 = scmp.ne.s32.totalorder %s340, %s343
      %p349 = scmp.eq.s32.totalorder %s32, 0
      %p350 = por %p348, %p349
      %p351 = scmp.ne.s32.totalorder %s340, %s343
      %p352 = scmp.eq.s32.totalorder %s37, 3
      %p353 = por %p351, %p352
      %p354 = scmp.ne.s32.totalorder %s343, %s344
      %p355 = scmp.eq.s32.totalorder %s37, 0
      %p356 = por %p354, %p355
      %p357 = scmp.ne.s32.totalorder %s343, %s344
      %p358 = scmp.eq.s32.totalorder %s38, 3
      %p359 = por %p357, %p358
      %p361 = scmp.ne.s32.totalorder %s344, %s360
      %p362 = scmp.eq.s32.totalorder %s38, 0
      %p363 = por %p361, %p362
      %s364 = ssub.s32 %s40, %s47
      %p365 = scmp.eq.s32.totalorder %s364, 0
      %s367 = sadd.s32 %s366, 1
      %s368 = scalar_select %p365, %s366, %s367
      %p371 = pneg %p365
      %p372 = scmp.eq.s32.totalorder %s32, 3
      %p373 = por %p371, %p372
      %p374 = scmp.ne.s32.totalorder %s366, %s369
      %p375 = scmp.eq.s32.totalorder %s32, 0
      %p376 = por %p374, %p375
      %p377 = scmp.ne.s32.totalorder %s366, %s369
      %p378 = scmp.eq.s32.totalorder %s37, 3
      %p379 = por %p377, %p378
      %p380 = scmp.ne.s32.totalorder %s369, %s370
      %p381 = scmp.eq.s32.totalorder %s37, 0
      %p382 = por %p380, %p381
      %p383 = scmp.ne.s32.totalorder %s369, %s370
      %p384 = scmp.eq.s32.totalorder %s38, 3
      %p385 = por %p383, %p384
      %p387 = scmp.ne.s32.totalorder %s370, %s386
      %p388 = scmp.eq.s32.totalorder %s38, 0
      %p389 = por %p387, %p388
      %s390 = ssub.s32 %s40, %s47
      %p391 = scmp.eq.s32.totalorder %s390, 0
      %s393 = sadd.s32 %s392, 1
      %s394 = scalar_select %p391, %s392, %s393
      %p397 = pneg %p391
      %p398 = scmp.eq.s32.totalorder %s32, 3
      %p399 = por %p397, %p398
      %p400 = scmp.ne.s32.totalorder %s392, %s395
      %p401 = scmp.eq.s32.totalorder %s32, 0
      %p402 = por %p400, %p401
      %p403 = scmp.ne.s32.totalorder %s392, %s395
      %p404 = scmp.eq.s32.totalorder %s37, 3
      %p405 = por %p403, %p404
      %p406 = scmp.ne.s32.totalorder %s395, %s396
      %p407 = scmp.eq.s32.totalorder %s37, 0
      %p408 = por %p406, %p407
      %p409 = scmp.ne.s32.totalorder %s395, %s396
      %p410 = scmp.eq.s32.totalorder %s38, 3
      %p411 = por %p409, %p410
      %p413 = scmp.ne.s32.totalorder %s396, %s412
      %p414 = scmp.eq.s32.totalorder %s38, 0
      %p415 = por %p413, %p414
      %s416 = ssub.s32 %s39, %s51
      %p417 = scmp.eq.s32.totalorder %s416, 0
      %s419 = sadd.s32 %s418, 1
      %s420 = scalar_select %p417, %s418, %s419
      %p423 = pneg %p417
      %p424 = scmp.eq.s32.totalorder %s32, 3
      %p425 = por %p423, %p424
      %p426 = scmp.ne.s32.totalorder %s418, %s421
      %p427 = scmp.eq.s32.totalorder %s32, 0
      %p428 = por %p426, %p427
      %p429 = scmp.ne.s32.totalorder %s418, %s421
      %p430 = scmp.eq.s32.totalorder %s37, 3
      %p431 = por %p429, %p430
      %p432 = scmp.ne.s32.totalorder %s421, %s422
      %p433 = scmp.eq.s32.totalorder %s37, 0
      %p434 = por %p432, %p433
      %p435 = scmp.ne.s32.totalorder %s421, %s422
      %p436 = scmp.eq.s32.totalorder %s38, 3
      %p437 = por %p435, %p436
      %p439 = scmp.ne.s32.totalorder %s422, %s438
      %p440 = scmp.eq.s32.totalorder %s38, 0
      %p441 = por %p439, %p440
      %p442 = scmp.le.s32.totalorder 1, %s32
      %p443 = scmp.lt.s32.totalorder %s32, 5
      %p444 = pnand %p442, %p443
      %p445 = pneg %p444
      // Predicated region
      $region9: #{tpu_custom_call.1} parent=5 // pred_check
        _
      $region10: #{tpu_custom_call.1} parent=5 // pred_check_branch
        %447 = sbr.rel (%p444) target = $region12
      $region11: #{tpu_custom_call.1} parent=5 // pred_region
        %s448 = ssub.s32 %s32, 1
      $region12: #{tpu_custom_call.1} parent=5 // pred_fallthru
        _
      %p449 = scmp.lt.s32.totalorder %s32, 4
      // Predicated region
      $region13: #{tpu_custom_call.1} parent=5 // pred_check
        %p450 = pneg %p449
      $region14: #{tpu_custom_call.1} parent=5 // pred_check_branch
        %452 = sbr.rel (%p450) target = $region16
      $region15: #{tpu_custom_call.1} parent=5 // pred_region
        // Predicated region
        $region17: #{tpu_custom_call.1} parent=15 // pred_check
          %p453 = pneg %p64
        $region18: #{tpu_custom_call.1} parent=15 // pred_check_branch
          %455 = sbr.rel (%p453) target = $region20
        $region19: #{tpu_custom_call.1} parent=15 // pred_region
          %s456 = sand.u32 %s54, 1
          %s457 = scalar_lea.sflag [#allocation3], %s456
          %s458 = sand.u32 %s54, 1
          %s459 = smul.addr %s458, 8
          %s460 = scalar_lea.vmem [#allocation2], %s459
          %462 = vsyncadd %s457, 0
          %s463 = smul.addr %s39, 8
          %s464 = scalar_lea.hbm %s0, %s463
          %s466 = sshll.u32 %s464, 4
          %s467 = int_to_ptr.hbm [resolvable:$true] %s466
          %s468 = sshll.u32 %s460, 4
          %s469 = int_to_ptr.vmem [resolvable:$true] %s468
          %471 = dma.hbm_to_vmem [thread:$0]  %s467, 128, %s469, %s457
        $region20: #{tpu_custom_call.1} parent=15 // pred_fallthru
          _
        // Predicated region
        $region21: #{tpu_custom_call.1} parent=15 // pred_check
          %p472 = pneg %p90
        $region22: #{tpu_custom_call.1} parent=15 // pred_check_branch
          %474 = sbr.rel (%p472) target = $region24
        $region23: #{tpu_custom_call.1} parent=15 // pred_region
          %p475 = scmp.lt.s32.totalorder %s40, 1
          %s476 = scalar_select %p475, %s40, 1
          %s477 = smul.addr %s476, 4
          %s478 = smul.addr %s477, 8
          %s479 = scalar_lea.vmem %s1, %s478
        $region24: #{tpu_custom_call.1} parent=15 // pred_fallthru
          _
        // Predicated region
        $region25: #{tpu_custom_call.1} parent=15 // pred_check
          %p480 = pneg %p116
        $region26: #{tpu_custom_call.1} parent=15 // pred_check_branch
          %482 = sbr.rel (%p480) target = $region28
        $region27: #{tpu_custom_call.1} parent=15 // pred_region
          %p483 = scmp.lt.s32.totalorder %s40, 1
          %s484 = scalar_select %p483, %s40, 1
          %s485 = smul.addr %s484, 4
          %s486 = smul.addr %s485, 8
          %s487 = scalar_lea.vmem %s2, %s486
        $region28: #{tpu_custom_call.1} parent=15 // pred_fallthru
          _
        // Predicated region
        $region29: #{tpu_custom_call.1} parent=15 // pred_check
          %p488 = pneg %p142
        $region30: #{tpu_custom_call.1} parent=15 // pred_check_branch
          %490 = sbr.rel (%p488) target = $region32
        $region31: #{tpu_custom_call.1} parent=15 // pred_region
          %p491 = scmp.lt.s32.totalorder %s40, 1
          %s492 = scalar_select %p491, %s40, 1
          %s493 = smul.addr %s492, 4
          %s494 = smul.addr %s493, 8
          %s495 = scalar_lea.vmem %s3, %s494
        $region32: #{tpu_custom_call.1} parent=15 // pred_fallthru
          _
        // Predicated region
        $region33: #{tpu_custom_call.1} parent=15 // pred_check
          %p496 = pneg %p168
        $region34: #{tpu_custom_call.1} parent=15 // pred_check_branch
          %498 = sbr.rel (%p496) target = $region36
        $region35: #{tpu_custom_call.1} parent=15 // pred_region
          %s499 = sand.u32 %s32, 1
          %s500 = scalar_lea.sflag [#allocation6], %s499
          %s501 = sand.u32 %s158, 1
          %s502 = smul.addr %s501, 32
          %s503 = scalar_lea.vmem [#allocation5], %s502
          %505 = vsyncadd %s500, 0
          %s506 = smul.addr %s40, 4
          %s507 = smul.addr %s506, 8
          %s508 = scalar_lea.hbm %s4, %s507
          %s509 = sshll.u32 %s508, 4
          %s510 = int_to_ptr.hbm [resolvable:$true] %s509
          %s511 = sshll.u32 %s503, 4
          %s512 = int_to_ptr.vmem [resolvable:$true] %s511
          %517 = dma.hbm_to_vmem [thread:$0]  %s510, 512, %s512, %s500, 128, 128, 8
        $region36: #{tpu_custom_call.1} parent=15 // pred_fallthru
          _
        // Predicated region
        $region37: #{tpu_custom_call.1} parent=15 // pred_check
          %p518 = pneg %p194
        $region38: #{tpu_custom_call.1} parent=15 // pred_check_branch
          %520 = sbr.rel (%p518) target = $region40
        $region39: #{tpu_custom_call.1} parent=15 // pred_region
          %p521 = scmp.lt.s32.totalorder %s40, 1
          %s522 = scalar_select %p521, %s40, 1
          %s523 = scalar_lea.vmem %s5, %s522
        $region40: #{tpu_custom_call.1} parent=15 // pred_fallthru
          _
        // Predicated region
        $region41: #{tpu_custom_call.1} parent=15 // pred_check
          %p524 = pneg %p220
        $region42: #{tpu_custom_call.1} parent=15 // pred_check_branch
          %526 = sbr.rel (%p524) target = $region44
        $region43: #{tpu_custom_call.1} parent=15 // pred_region
          %p527 = scmp.lt.s32.totalorder %s40, 1
          %s528 = scalar_select %p527, %s40, 1
          %s529 = scalar_lea.vmem %s6, %s528
        $region44: #{tpu_custom_call.1} parent=15 // pred_fallthru
          _
        // Predicated region
        $region45: #{tpu_custom_call.1} parent=15 // pred_check
          %p530 = pneg %p246
        $region46: #{tpu_custom_call.1} parent=15 // pred_check_branch
          %532 = sbr.rel (%p530) target = $region48
        $region47: #{tpu_custom_call.1} parent=15 // pred_region
          %s533 = sand.u32 %s32, 1
          %s534 = scalar_lea.sflag [#allocation6], %s533
          %s535 = sand.u32 %s236, 1
          %s536 = scalar_lea.vmem [#allocation7], %s535
          %538 = vsyncadd %s534, 0
          %s539 = scalar_lea.hbm %s7, %s40
          %s541 = sshll.u32 %s539, 4
          %s542 = int_to_ptr.hbm [resolvable:$true] %s541
          %s543 = sshll.u32 %s536, 4
          %s544 = int_to_ptr.vmem [resolvable:$true] %s543
          %546 = dma.hbm_to_vmem [thread:$0]  %s542, 16, %s544, %s534
        $region48: #{tpu_custom_call.1} parent=15 // pred_fallthru
          _
        // Predicated region
        $region49: #{tpu_custom_call.1} parent=15 // pred_check
          %p547 = pneg %p272
        $region50: #{tpu_custom_call.1} parent=15 // pred_check_branch
          %549 = sbr.rel (%p547) target = $region52
        $region51: #{tpu_custom_call.1} parent=15 // pred_region
          %s550 = sand.u32 %s32, 1
          %s551 = scalar_lea.sflag [#allocation9], %s550
          %s552 = sand.u32 %s262, 1
          %s553 = smul.addr %s552, 32
          %s554 = scalar_lea.vmem [#allocation8], %s553
          %556 = vsyncadd %s551, 0
          %s557 = smul.addr %s40, 4
          %s558 = smul.addr %s557, 8
          %s559 = scalar_lea.hbm %s8, %s558
          %s560 = sshll.u32 %s559, 4
          %s561 = int_to_ptr.hbm [resolvable:$true] %s560
          %s562 = sshll.u32 %s554, 4
          %s563 = int_to_ptr.vmem [resolvable:$true] %s562
          %568 = dma.hbm_to_vmem [thread:$0]  %s561, 512, %s563, %s551, 128, 128, 8
        $region52: #{tpu_custom_call.1} parent=15 // pred_fallthru
          _
        // Predicated region
        $region53: #{tpu_custom_call.1} parent=15 // pred_check
          %p569 = pneg %p298
        $region54: #{tpu_custom_call.1} parent=15 // pred_check_branch
          %571 = sbr.rel (%p569) target = $region56
        $region55: #{tpu_custom_call.1} parent=15 // pred_region
          %p572 = scmp.lt.s32.totalorder %s40, 1
          %s573 = scalar_select %p572, %s40, 1
          %s574 = scalar_lea.vmem %s9, %s573
        $region56: #{tpu_custom_call.1} parent=15 // pred_fallthru
          _
        // Predicated region
        $region57: #{tpu_custom_call.1} parent=15 // pred_check
          %p575 = pneg %p324
        $region58: #{tpu_custom_call.1} parent=15 // pred_check_branch
          %577 = sbr.rel (%p575) target = $region60
        $region59: #{tpu_custom_call.1} parent=15 // pred_region
          %p578 = scmp.lt.s32.totalorder %s40, 1
          %s579 = scalar_select %p578, %s40, 1
          %s580 = smul.addr %s579, 8
          %s581 = smul.addr %s580, 8
          %s582 = scalar_lea.vmem %s10, %s581
        $region60: #{tpu_custom_call.1} parent=15 // pred_fallthru
          _
        // Predicated region
        $region61: #{tpu_custom_call.1} parent=15 // pred_check
          %p583 = pneg %p350
        $region62: #{tpu_custom_call.1} parent=15 // pred_check_branch
          %585 = sbr.rel (%p583) target = $region64
        $region63: #{tpu_custom_call.1} parent=15 // pred_region
          %p586 = scmp.lt.s32.totalorder %s40, 1
          %s587 = scalar_select %p586, %s40, 1
          %s588 = scalar_lea.vmem %s11, %s587
        $region64: #{tpu_custom_call.1} parent=15 // pred_fallthru
          _
        // Predicated region
        $region65: #{tpu_custom_call.1} parent=15 // pred_check
          %p589 = pneg %p376
        $region66: #{tpu_custom_call.1} parent=15 // pred_check_branch
          %591 = sbr.rel (%p589) target = $region68
        $region67: #{tpu_custom_call.1} parent=15 // pred_region
          %p592 = scmp.lt.s32.totalorder %s40, 1
          %s593 = scalar_select %p592, %s40, 1
          %s594 = scalar_lea.vmem %s12, %s593
        $region68: #{tpu_custom_call.1} parent=15 // pred_fallthru
          _
        // Predicated region
        $region69: #{tpu_custom_call.1} parent=15 // pred_check
          %p595 = pneg %p402
        $region70: #{tpu_custom_call.1} parent=15 // pred_check_branch
          %597 = sbr.rel (%p595) target = $region72
        $region71: #{tpu_custom_call.1} parent=15 // pred_region
          %s598 = sand.u32 %s32, 1
          %s599 = scalar_lea.sflag [#allocation9], %s598
          %s600 = sand.u32 %s392, 1
          %s601 = scalar_lea.vmem [#allocation10], %s600
          %603 = vsyncadd %s599, 0
          %s604 = scalar_lea.hbm %s13, %s40
          %s606 = sshll.u32 %s604, 4
          %s607 = int_to_ptr.hbm [resolvable:$true] %s606
          %s608 = sshll.u32 %s601, 4
          %s609 = int_to_ptr.vmem [resolvable:$true] %s608
          %611 = dma.hbm_to_vmem [thread:$0]  %s607, 16, %s609, %s599
        $region72: #{tpu_custom_call.1} parent=15 // pred_fallthru
          _
      $region16: #{tpu_custom_call.1} parent=5 // pred_fallthru
        _
      %p612 = scmp.le.s32.totalorder 1, %s32
      %p613 = scmp.lt.s32.totalorder %s32, 5
      %p614 = pnand %p612, %p613
      %p615 = pneg %p614
      // Predicated region
      $region73: #{tpu_custom_call.1} parent=5 // pred_check
        _
      $region74: #{tpu_custom_call.1} parent=5 // pred_check_branch
        %617 = sbr.rel (%p614) target = $region76
      $region75: #{tpu_custom_call.1} parent=5 // pred_region
        %s618 = ssub.s32 %s32, 1
        %s619 = sand.u32 %s57, 1
        %s620 = scalar_lea.sflag [#allocation3], %s619
        %s621 = sand.u32 %s57, 1
        %s622 = smul.addr %s621, 8
        %s623 = scalar_lea.vmem [#allocation2], %s622
        // Predicated region
        $region77: #{tpu_custom_call.1} parent=75 // pred_check
          %p624 = pneg %p70
        $region78: #{tpu_custom_call.1} parent=75 // pred_check_branch
          %626 = sbr.rel (%p624) target = $region80
        $region79: #{tpu_custom_call.1} parent=75 // pred_region
          %628 = dma.done %s620, 128
        $region80: #{tpu_custom_call.1} parent=75 // pred_fallthru
          _
        %s629 = sand.u32 %s37, 1
        %s630 = scalar_lea.sflag [#allocation6], %s629
        %s631 = sand.u32 %s161, 1
        %s632 = smul.addr %s631, 32
        %s633 = scalar_lea.vmem [#allocation5], %s632
        // Predicated region
        $region81: #{tpu_custom_call.1} parent=75 // pred_check
          %p634 = pneg %p174
        $region82: #{tpu_custom_call.1} parent=75 // pred_check_branch
          %636 = sbr.rel (%p634) target = $region84
        $region83: #{tpu_custom_call.1} parent=75 // pred_region
          %638 = dma.done %s630, 512
        $region84: #{tpu_custom_call.1} parent=75 // pred_fallthru
          _
        %s639 = sand.u32 %s37, 1
        %s640 = scalar_lea.sflag [#allocation6], %s639
        %s641 = sand.u32 %s239, 1
        %s642 = scalar_lea.vmem [#allocation7], %s641
        // Predicated region
        $region85: #{tpu_custom_call.1} parent=75 // pred_check
          %p643 = pneg %p252
        $region86: #{tpu_custom_call.1} parent=75 // pred_check_branch
          %645 = sbr.rel (%p643) target = $region88
        $region87: #{tpu_custom_call.1} parent=75 // pred_region
          %647 = dma.done %s640, 16
        $region88: #{tpu_custom_call.1} parent=75 // pred_fallthru
          _
        %s648 = sand.u32 %s37, 1
        %s649 = scalar_lea.sflag [#allocation9], %s648
        %s650 = sand.u32 %s265, 1
        %s651 = smul.addr %s650, 32
        %s652 = scalar_lea.vmem [#allocation8], %s651
        // Predicated region
        $region89: #{tpu_custom_call.1} parent=75 // pred_check
          %p653 = pneg %p278
        $region90: #{tpu_custom_call.1} parent=75 // pred_check_branch
          %655 = sbr.rel (%p653) target = $region92
        $region91: #{tpu_custom_call.1} parent=75 // pred_region
          %657 = dma.done %s649, 512
        $region92: #{tpu_custom_call.1} parent=75 // pred_fallthru
          _
        %s658 = sand.u32 %s37, 1
        %s659 = scalar_lea.sflag [#allocation9], %s658
        %s660 = sand.u32 %s395, 1
        %s661 = scalar_lea.vmem [#allocation10], %s660
        // Predicated region
        $region93: #{tpu_custom_call.1} parent=75 // pred_check
          %p662 = pneg %p408
        $region94: #{tpu_custom_call.1} parent=75 // pred_check_branch
          %664 = sbr.rel (%p662) target = $region96
        $region95: #{tpu_custom_call.1} parent=75 // pred_region
          %666 = dma.done %s659, 16
        $region96: #{tpu_custom_call.1} parent=75 // pred_fallthru
          _
        %s667 = sand.u32 %s57, 1
        %s668 = scalar_lea.sflag [#allocation3], %s667
        %s669 = sand.u32 %s57, 1
        %s670 = smul.addr %s669, 8
        %s671 = scalar_lea.vmem [#allocation2], %s670
        %p672 = pneg %p70
        %p673 = pneg %p67
        %p674 = scmp.lt.s32.totalorder %s42, 1
        %s675 = scalar_select %p674, %s42, 1
        %s676 = smul.addr %s675, 4
        %s677 = smul.addr %s676, 8
        %s678 = scalar_lea.vmem %s1, %s677
        %p679 = pneg %p96
        %p680 = pneg %p93
        %p681 = scmp.lt.s32.totalorder %s42, 1
        %s682 = scalar_select %p681, %s42, 1
        %s683 = smul.addr %s682, 4
        %s684 = smul.addr %s683, 8
        %s685 = scalar_lea.vmem %s2, %s684
        %p686 = pneg %p122
        %p687 = pneg %p119
        %p688 = scmp.lt.s32.totalorder %s42, 1
        %s689 = scalar_select %p688, %s42, 1
        %s690 = smul.addr %s689, 4
        %s691 = smul.addr %s690, 8
        %s692 = scalar_lea.vmem %s3, %s691
        %p693 = pneg %p148
        %p694 = pneg %p145
        %s695 = sand.u32 %s37, 1
        %s696 = scalar_lea.sflag [#allocation6], %s695
        %s697 = sand.u32 %s161, 1
        %s698 = smul.addr %s697, 32
        %s699 = scalar_lea.vmem [#allocation5], %s698
        %p700 = pneg %p174
        %p701 = pneg %p171
        %p702 = scmp.lt.s32.totalorder %s42, 1
        %s703 = scalar_select %p702, %s42, 1
        %s704 = scalar_lea.vmem %s5, %s703
        %p705 = pneg %p200
        %p706 = pneg %p197
        %p707 = scmp.lt.s32.totalorder %s42, 1
        %s708 = scalar_select %p707, %s42, 1
        %s709 = scalar_lea.vmem %s6, %s708
        %p710 = pneg %p226
        %p711 = pneg %p223
        %s712 = sand.u32 %s37, 1
        %s713 = scalar_lea.sflag [#allocation6], %s712
        %s714 = sand.u32 %s239, 1
        %s715 = scalar_lea.vmem [#allocation7], %s714
        %p716 = pneg %p252
        %p717 = pneg %p249
        %s718 = sand.u32 %s37, 1
        %s719 = scalar_lea.sflag [#allocation9], %s718
        %s720 = sand.u32 %s265, 1
        %s721 = smul.addr %s720, 32
        %s722 = scalar_lea.vmem [#allocation8], %s721
        %p723 = pneg %p278
        %p724 = pneg %p275
        %p725 = scmp.lt.s32.totalorder %s42, 1
        %s726 = scalar_select %p725, %s42, 1
        %s727 = scalar_lea.vmem %s9, %s726
        %p728 = pneg %p304
        %p729 = pneg %p301
        %p730 = scmp.lt.s32.totalorder %s42, 1
        %s731 = scalar_select %p730, %s42, 1
        %s732 = smul.addr %s731, 8
        %s733 = smul.addr %s732, 8
        %s734 = scalar_lea.vmem %s10, %s733
        %p735 = pneg %p330
        %p736 = pneg %p327
        %p737 = scmp.lt.s32.totalorder %s42, 1
        %s738 = scalar_select %p737, %s42, 1
        %s739 = scalar_lea.vmem %s11, %s738
        %p740 = pneg %p356
        %p741 = pneg %p353
        %p742 = scmp.lt.s32.totalorder %s42, 1
        %s743 = scalar_select %p742, %s42, 1
        %s744 = scalar_lea.vmem %s12, %s743
        %p745 = pneg %p382
        %p746 = pneg %p379
        %s747 = sand.u32 %s37, 1
        %s748 = scalar_lea.sflag [#allocation9], %s747
        %s749 = sand.u32 %s395, 1
        %s750 = scalar_lea.vmem [#allocation10], %s749
        %p751 = pneg %p408
        %p752 = pneg %p405
        %p753 = pneg %p434
        %p754 = pneg %p431
        %s755 = sand.u32 %s421, 1
        %s756 = scalar_lea.sflag [#allocation4], %s755
        %s757 = sand.u32 %s421, 1
        %s758 = smul.addr %s757, 8
        %s759 = scalar_lea.vmem [#allocation11], %s758
        %p760 = scmp.lt.s32.totalorder %s42, 1
        %s761 = scalar_select %p760, %s42, 1
        %s762 = smul.addr %s761, 4
        %s763 = smul.addr %s762, 8
        %s764 = scalar_lea.vmem %s1, %s763
        %p765 = scmp.lt.s32.totalorder %s42, 1
        %s766 = scalar_select %p765, %s42, 1
        %s767 = smul.addr %s766, 4
        %s768 = smul.addr %s767, 8
        %s769 = scalar_lea.vmem %s2, %s768
        %p770 = scmp.lt.s32.totalorder %s42, 1
        %s771 = scalar_select %p770, %s42, 1
        %s772 = smul.addr %s771, 4
        %s773 = smul.addr %s772, 8
        %s774 = scalar_lea.vmem %s3, %s773
        %p775 = scmp.lt.s32.totalorder %s42, 1
        %s776 = scalar_select %p775, %s42, 1
        %s777 = scalar_lea.vmem %s5, %s776
        %p778 = scmp.lt.s32.totalorder %s42, 1
        %s779 = scalar_select %p778, %s42, 1
        %s780 = scalar_lea.vmem %s6, %s779
        %p781 = scmp.lt.s32.totalorder %s42, 1
        %s782 = scalar_select %p781, %s42, 1
        %s783 = scalar_lea.vmem %s9, %s782
        %p784 = scmp.lt.s32.totalorder %s42, 1
        %s785 = scalar_select %p784, %s42, 1
        %s786 = smul.addr %s785, 8
        %s787 = smul.addr %s786, 8
        %s788 = scalar_lea.vmem %s10, %s787
        %p789 = scmp.lt.s32.totalorder %s42, 1
        %s790 = scalar_select %p789, %s42, 1
        %s791 = scalar_lea.vmem %s11, %s790
        %p792 = scmp.lt.s32.totalorder %s42, 1
        %s793 = scalar_select %p792, %s42, 1
        %s794 = scalar_lea.vmem %s12, %s793
        %p795 = scmp.eq.s32.totalorder %s42, 0
        // Predicated region
        $region97: #{tpu_custom_call.1} parent=75 // pred_check
          %p796 = pneg %p795
        $region98: #{tpu_custom_call.1} parent=75 // pred_check_branch
          %798 = sbr.rel (%p796) target = $region100
        $region99: #{tpu_custom_call.1} parent=75 // pred_region
          %v799 = vld [vmem:[%s623] sm:$0xff]
          %vm800 = vcmask 261120
          %801 = vst.msk [vmem:[%s759] sm:$0xff] %vm800, %v799
        $region100: #{tpu_custom_call.1} parent=75 // pred_fallthru
          _
        %v802 = vld [vmem:[%s759] sm:$0xff]
        %v803 = vld [vmem:[%s764] sm:$0xff]
        %v804 = vld [vmem:[%s764 + $0x8] sm:$0xff]
        %v805 = vld [vmem:[%s764 + $0x10] sm:$0xff]
        %v806 = vld [vmem:[%s764 + $0x18] sm:$0xff]
        %vm807 = vcmask 261120
        %v809 = vsel %vm807, %v802, 0
        %811 = vmatpush.msra.mxu0 0.0
        %812 = vmatpush.msra.mxu0 0.0
        %813 = vmatpush.msra.mxu0 0.0
        %814 = vmatpush.msra.mxu0 0.0
        %815 = vmatpush.msra.mxu0 0.0
        %816 = vmatpush.msra.mxu0 0.0
        %817 = vmatpush.msra.mxu0 0.0
        %818 = vmatpush.msra.mxu0 0.0
        %819 = vmatpush.msra.mxu0 0.0
        %820 = vmatpush.msra.mxu0 0.0
        %821 = vmatpush.msra.mxu0 0.0
        %822 = vmatpush.msra.mxu0 0.0
        %823 = vmatpush.msra.mxu0 %v806
        %824 = vmatpush.msra.mxu0 %v805
        %825 = vmatpush.msra.mxu0 %v804
        %826 = vmatpush.msra.mxu0 %v803
        %827 = vmatmul.f32.gmra.mxu0 %v809
        %v828 = vpop.f32.mrf.mxu0
        %v829 = vadd.f32 0.0, %v828
        %830 = vdwg.mxu0
        %v831 = vld [vmem:[%s769] sm:$0xff]
        %v832 = vld [vmem:[%s769 + $0x8] sm:$0xff]
        %v833 = vld [vmem:[%s769 + $0x10] sm:$0xff]
        %v834 = vld [vmem:[%s769 + $0x18] sm:$0xff]
        %835 = vmatpush.msra.mxu0 0.0
        %836 = vmatpush.msra.mxu0 0.0
        %837 = vmatpush.msra.mxu0 0.0
        %838 = vmatpush.msra.mxu0 0.0
        %839 = vmatpush.msra.mxu0 0.0
        %840 = vmatpush.msra.mxu0 0.0
        %841 = vmatpush.msra.mxu0 0.0
        %842 = vmatpush.msra.mxu0 0.0
        %843 = vmatpush.msra.mxu0 0.0
        %844 = vmatpush.msra.mxu0 0.0
        %845 = vmatpush.msra.mxu0 0.0
        %846 = vmatpush.msra.mxu0 0.0
        %847 = vmatpush.msra.mxu0 %v834
        %848 = vmatpush.msra.mxu0 %v833
        %849 = vmatpush.msra.mxu0 %v832
        %850 = vmatpush.msra.mxu0 %v831
        %851 = vmatmul.f32.gmra.mxu0 %v809
        %v852 = vpop.f32.mrf.mxu0
        %v853 = vadd.f32 0.0, %v852
        %854 = vdwg.mxu0
        %v855 = vld [vmem:[%s774] sm:$0xff]
        %v856 = vld [vmem:[%s774 + $0x8] sm:$0xff]
        %v857 = vld [vmem:[%s774 + $0x10] sm:$0xff]
        %v858 = vld [vmem:[%s774 + $0x18] sm:$0xff]
        %859 = vmatpush.msra.mxu0 0.0
        %860 = vmatpush.msra.mxu0 0.0
        %861 = vmatpush.msra.mxu0 0.0
        %862 = vmatpush.msra.mxu0 0.0
        %863 = vmatpush.msra.mxu0 0.0
        %864 = vmatpush.msra.mxu0 0.0
        %865 = vmatpush.msra.mxu0 0.0
        %866 = vmatpush.msra.mxu0 0.0
        %867 = vmatpush.msra.mxu0 0.0
        %868 = vmatpush.msra.mxu0 0.0
        %869 = vmatpush.msra.mxu0 0.0
        %870 = vmatpush.msra.mxu0 0.0
        %871 = vmatpush.msra.mxu0 %v858
        %872 = vmatpush.msra.mxu0 %v857
        %873 = vmatpush.msra.mxu0 %v856
        %874 = vmatpush.msra.mxu0 %v855
        %875 = vmatmul.f32.gmra.mxu0 %v809
        %v876 = vpop.f32.mrf.mxu0
        %v877 = vadd.f32 0.0, %v876
        %878 = vdwg.mxu0
        %880 = vrot.lane.b32.xlu0 %v829, 120
        %v881 = vpop.permute.xlu0 %880
        %882 = vrot.lane.b32.xlu0 %v829, 112
        %v883 = vpop.permute.xlu0 %882
        %884 = vrot.lane.b32.xlu0 %v829, 104
        %v885 = vpop.permute.xlu0 %884
        %887 = vrot.lane.b32.xlu0 %v853, 120
        %v888 = vpop.permute.xlu0 %887
        %889 = vrot.lane.b32.xlu0 %v853, 112
        %v890 = vpop.permute.xlu0 %889
        %891 = vrot.lane.b32.xlu0 %v853, 104
        %v892 = vpop.permute.xlu0 %891
        %894 = vrot.lane.b32.xlu0 %v877, 120
        %v895 = vpop.permute.xlu0 %894
        %897 = vrot.lane.b32.xlu0 %v877, 112
        %v898 = vpop.permute.xlu0 %897
        %900 = vrot.lane.b32.xlu0 %v877, 104
        %v901 = vpop.permute.xlu0 %900
        %vm903 = vcmask 64512
        %v904 = vsel %vm903, %v829, 0
        %v906 = vsel %vm903, %v853, 0
        %908 = vmatpush.xpose.msra.mxu0 0.0
        %909 = vmatpush.xpose.msra.mxu0 0.0
        %910 = vmatpush.xpose.msra.mxu0 0.0
        %911 = vmatpush.xpose.msra.mxu0 0.0
        %912 = vmatpush.xpose.msra.mxu0 0.0
        %913 = vmatpush.xpose.msra.mxu0 0.0
        %914 = vmatpush.xpose.msra.mxu0 0.0
        %915 = vmatpush.xpose.msra.mxu0 0.0
        %916 = vmatpush.xpose.msra.mxu0 0.0
        %917 = vmatpush.xpose.msra.mxu0 0.0
        %918 = vmatpush.xpose.msra.mxu0 0.0
        %919 = vmatpush.xpose.msra.mxu0 0.0
        %920 = vmatpush.xpose.msra.mxu0 0.0
        %921 = vmatpush.xpose.msra.mxu0 0.0
        %922 = vmatpush.xpose.msra.mxu0 0.0
        %923 = vmatpush.xpose.msra.mxu0 %v906
        %924 = vmatmul.f32.gmra.mxu0 %v904
        %v925 = vpop.f32.mrf.mxu0
        %v926 = vadd.f32 0.0, %v925
        %927 = vdwg.mxu0
        %v928 = vsel %vm903, %v881, 0
        %v930 = vsel %vm903, %v888, 0
        %932 = vmatpush.xpose.msra.mxu0 0.0
        %933 = vmatpush.xpose.msra.mxu0 0.0
        %934 = vmatpush.xpose.msra.mxu0 0.0
        %935 = vmatpush.xpose.msra.mxu0 0.0
        %936 = vmatpush.xpose.msra.mxu0 0.0
        %937 = vmatpush.xpose.msra.mxu0 0.0
        %938 = vmatpush.xpose.msra.mxu0 0.0
        %939 = vmatpush.xpose.msra.mxu0 0.0
        %940 = vmatpush.xpose.msra.mxu0 0.0
        %941 = vmatpush.xpose.msra.mxu0 0.0
        %942 = vmatpush.xpose.msra.mxu0 0.0
        %943 = vmatpush.xpose.msra.mxu0 0.0
        %944 = vmatpush.xpose.msra.mxu0 0.0
        %945 = vmatpush.xpose.msra.mxu0 0.0
        %946 = vmatpush.xpose.msra.mxu0 0.0
        %947 = vmatpush.xpose.msra.mxu0 %v930
        %948 = vmatmul.f32.gmra.mxu0 %v928
        %v949 = vpop.f32.mrf.mxu0
        %v950 = vadd.f32 0.0, %v949
        %951 = vdwg.mxu0
        %v952 = vsel %vm903, %v883, 0
        %v954 = vsel %vm903, %v890, 0
        %956 = vmatpush.xpose.msra.mxu0 0.0
        %957 = vmatpush.xpose.msra.mxu0 0.0
        %958 = vmatpush.xpose.msra.mxu0 0.0
        %959 = vmatpush.xpose.msra.mxu0 0.0
        %960 = vmatpush.xpose.msra.mxu0 0.0
        %961 = vmatpush.xpose.msra.mxu0 0.0
        %962 = vmatpush.xpose.msra.mxu0 0.0
        %963 = vmatpush.xpose.msra.mxu0 0.0
        %964 = vmatpush.xpose.msra.mxu0 0.0
        %965 = vmatpush.xpose.msra.mxu0 0.0
        %966 = vmatpush.xpose.msra.mxu0 0.0
        %967 = vmatpush.xpose.msra.mxu0 0.0
        %968 = vmatpush.xpose.msra.mxu0 0.0
        %969 = vmatpush.xpose.msra.mxu0 0.0
        %970 = vmatpush.xpose.msra.mxu0 0.0
        %971 = vmatpush.xpose.msra.mxu0 %v954
        %972 = vmatmul.f32.gmra.mxu0 %v952
        %v973 = vpop.f32.mrf.mxu0
        %v974 = vadd.f32 0.0, %v973
        %975 = vdwg.mxu0
        %v976 = vsel %vm903, %v885, 0
        %v978 = vsel %vm903, %v892, 0
        %980 = vmatpush.xpose.msra.mxu0 0.0
        %981 = vmatpush.xpose.msra.mxu0 0.0
        %982 = vmatpush.xpose.msra.mxu0 0.0
        %983 = vmatpush.xpose.msra.mxu0 0.0
        %984 = vmatpush.xpose.msra.mxu0 0.0
        %985 = vmatpush.xpose.msra.mxu0 0.0
        %986 = vmatpush.xpose.msra.mxu0 0.0
        %987 = vmatpush.xpose.msra.mxu0 0.0
        %988 = vmatpush.xpose.msra.mxu0 0.0
        %989 = vmatpush.xpose.msra.mxu0 0.0
        %990 = vmatpush.xpose.msra.mxu0 0.0
        %991 = vmatpush.xpose.msra.mxu0 0.0
        %992 = vmatpush.xpose.msra.mxu0 0.0
        %993 = vmatpush.xpose.msra.mxu0 0.0
        %994 = vmatpush.xpose.msra.mxu0 0.0
        %995 = vmatpush.xpose.msra.mxu0 %v978
        %996 = vmatmul.f32.gmra.mxu0 %v976
        %v997 = vpop.f32.mrf.mxu0
        %v998 = vadd.f32 0.0, %v997
        %999 = vdwg.mxu0
        %v1000 = vmul.f32 %v926, 0.35355338
        %v1001 = vmul.f32 %v950, 0.35355338
        %v1002 = vmul.f32 %v974, 0.35355338
        %v1003 = vmul.f32 %v998, 0.35355338
        %v1004 = vsel %vm903, %v1000, -inf
        %1005 = vmax.xlane.f32.xlu0 %v1004
        %v1006 = vpop.xlane.xlu0 %1005
        %v1007 = vsel %vm903, %v1001, -inf
        %1008 = vmax.xlane.f32.xlu0 %v1007
        %v1009 = vpop.xlane.xlu0 %1008
        %v1010 = vsel %vm903, %v1002, -inf
        %1011 = vmax.xlane.f32.xlu0 %v1010
        %v1012 = vpop.xlane.xlu0 %1011
        %v1013 = vsel %vm903, %v1003, -inf
        %1014 = vmax.xlane.f32.xlu0 %v1013
        %v1015 = vpop.xlane.xlu0 %1014
        %v1016 = vsub.f32 %v1000, %v1006
        %v1017 = vsub.f32 %v1001, %v1009
        %v1018 = vsub.f32 %v1002, %v1012
        %v1019 = vsub.f32 %v1003, %v1015
        %v1020 = vmul.f32 %v1016, 1.442695
        %v1021 = vpow.pop %v1020
        %v1022 = vmul.f32 %v1017, 1.442695
        %v1023 = vpow.pop %v1022
        %v1024 = vmul.f32 %v1018, 1.442695
        %v1025 = vpow.pop %v1024
        %v1026 = vmul.f32 %v1019, 1.442695
        %v1027 = vpow.pop %v1026
        %v1028 = vsel %vm903, %v1021, 0.0
        %1029 = vadd.xlane.f32.xlu0 %v1028
        %v1030 = vpop.xlane.xlu0 %1029
        %v1031 = vsel %vm903, %v1023, 0.0
        %1032 = vadd.xlane.f32.xlu0 %v1031
        %v1033 = vpop.xlane.xlu0 %1032
        %v1034 = vsel %vm903, %v1025, 0.0
        %1035 = vadd.xlane.f32.xlu0 %v1034
        %v1036 = vpop.xlane.xlu0 %1035
        %v1037 = vsel %vm903, %v1027, 0.0
        %1038 = vadd.xlane.f32.xlu0 %v1037
        %v1039 = vpop.xlane.xlu0 %1038
        %v1040 = vrcp.pop %v1030
        %v1041 = vrcp.pop %v1033
        %v1042 = vrcp.pop %v1036
        %v1043 = vrcp.pop %v1039
        %v1044 = vmul.f32 %v1021, %v1040
        %v1045 = vmul.f32 %v1023, %v1041
        %v1046 = vmul.f32 %v1025, %v1042
        %v1047 = vmul.f32 %v1027, %v1043
        %v1049 = vsel %vm903, %v1044, 0
        %1051 = vmatpush.msra.mxu0 0.0
        %1052 = vmatpush.msra.mxu0 0.0
        %1053 = vmatpush.msra.mxu0 0.0
        %1054 = vmatpush.msra.mxu0 0.0
        %1055 = vmatpush.msra.mxu0 0.0
        %1056 = vmatpush.msra.mxu0 0.0
        %1057 = vmatpush.msra.mxu0 0.0
        %1058 = vmatpush.msra.mxu0 0.0
        %1059 = vmatpush.msra.mxu0 0.0
        %1060 = vmatpush.msra.mxu0 0.0
        %1061 = vmatpush.msra.mxu0 0.0
        %1062 = vmatpush.msra.mxu0 0.0
        %1063 = vmatpush.msra.mxu0 0.0
        %1064 = vmatpush.msra.mxu0 0.0
        %1065 = vmatpush.msra.mxu0 0.0
        %1066 = vmatpush.msra.mxu0 %v877
        %1067 = vmatmul.f32.gmra.mxu0 %v1049
        %v1068 = vpop.f32.mrf.mxu0
        %v1069 = vadd.f32 0.0, %v1068
        %1070 = vdwg.mxu0
        %v1072 = vsel %vm903, %v1045, 0
        %1074 = vmatpush.msra.mxu0 0.0
        %1075 = vmatpush.msra.mxu0 0.0
        %1076 = vmatpush.msra.mxu0 0.0
        %1077 = vmatpush.msra.mxu0 0.0
        %1078 = vmatpush.msra.mxu0 0.0
        %1079 = vmatpush.msra.mxu0 0.0
        %1080 = vmatpush.msra.mxu0 0.0
        %1081 = vmatpush.msra.mxu0 0.0
        %1082 = vmatpush.msra.mxu0 0.0
        %1083 = vmatpush.msra.mxu0 0.0
        %1084 = vmatpush.msra.mxu0 0.0
        %1085 = vmatpush.msra.mxu0 0.0
        %1086 = vmatpush.msra.mxu0 0.0
        %1087 = vmatpush.msra.mxu0 0.0
        %1088 = vmatpush.msra.mxu0 0.0
        %1089 = vmatpush.msra.mxu0 %v895
        %1090 = vmatmul.f32.gmra.mxu0 %v1072
        %v1091 = vpop.f32.mrf.mxu0
        %v1092 = vadd.f32 0.0, %v1091
        %1093 = vdwg.mxu0
        %v1095 = vsel %vm903, %v1046, 0
        %1097 = vmatpush.msra.mxu0 0.0
        %1098 = vmatpush.msra.mxu0 0.0
        %1099 = vmatpush.msra.mxu0 0.0
        %1100 = vmatpush.msra.mxu0 0.0
        %1101 = vmatpush.msra.mxu0 0.0
        %1102 = vmatpush.msra.mxu0 0.0
        %1103 = vmatpush.msra.mxu0 0.0
        %1104 = vmatpush.msra.mxu0 0.0
        %1105 = vmatpush.msra.mxu0 0.0
        %1106 = vmatpush.msra.mxu0 0.0
        %1107 = vmatpush.msra.mxu0 0.0
        %1108 = vmatpush.msra.mxu0 0.0
        %1109 = vmatpush.msra.mxu0 0.0
        %1110 = vmatpush.msra.mxu0 0.0
        %1111 = vmatpush.msra.mxu0 0.0
        %1112 = vmatpush.msra.mxu0 %v898
        %1113 = vmatmul.f32.gmra.mxu0 %v1095
        %v1114 = vpop.f32.mrf.mxu0
        %v1115 = vadd.f32 0.0, %v1114
        %1116 = vdwg.mxu0
        %v1118 = vsel %vm903, %v1047, 0
        %1120 = vmatpush.msra.mxu0 0.0
        %1121 = vmatpush.msra.mxu0 0.0
        %1122 = vmatpush.msra.mxu0 0.0
        %1123 = vmatpush.msra.mxu0 0.0
        %1124 = vmatpush.msra.mxu0 0.0
        %1125 = vmatpush.msra.mxu0 0.0
        %1126 = vmatpush.msra.mxu0 0.0
        %1127 = vmatpush.msra.mxu0 0.0
        %1128 = vmatpush.msra.mxu0 0.0
        %1129 = vmatpush.msra.mxu0 0.0
        %1130 = vmatpush.msra.mxu0 0.0
        %1131 = vmatpush.msra.mxu0 0.0
        %1132 = vmatpush.msra.mxu0 0.0
        %1133 = vmatpush.msra.mxu0 0.0
        %1134 = vmatpush.msra.mxu0 0.0
        %1135 = vmatpush.msra.mxu0 %v901
        %1136 = vmatmul.f32.gmra.mxu0 %v1118
        %v1137 = vpop.f32.mrf.mxu0
        %v1138 = vadd.f32 0.0, %v1137
        %1139 = vdwg.mxu0
        %1141 = vrot.lane.b32.xlu0 %v1092, 8
        %v1142 = vpop.permute.xlu0 %1141
        %1145 = vrot.lane.b32.xlu0 %v1115, 16
        %v1146 = vpop.permute.xlu0 %1145
        %1149 = vrot.lane.b32.xlu0 %v1138, 24
        %v1150 = vpop.permute.xlu0 %1149
        %v1152 = vsel %vm903, %v1069, %v1142
        %vm1153 = vcmask 130048
        %v1154 = vsel %vm1153, %v1152, %v1146
        %vm1155 = vcmask 195584
        %v1156 = vsel %vm1155, %v1154, %v1150
        %v1157 = vld [vmem:[%s633] sm:$0xff]
        %v1158 = vld [vmem:[%s633 + $0x8] sm:$0xff]
        %v1159 = vld [vmem:[%s633 + $0x10] sm:$0xff]
        %v1160 = vld [vmem:[%s633 + $0x18] sm:$0xff]
        %v1161 = vld [vmem:[%s777] sm:$0x1]
        %v1163 = vperm.slane %v1161, 0
        %v1166 = vsel %vm807, %v1156, 0
        %1168 = vmatpush.msra.mxu0 0.0
        %1169 = vmatpush.msra.mxu0 0.0
        %1170 = vmatpush.msra.mxu0 0.0
        %1171 = vmatpush.msra.mxu0 0.0
        %1172 = vmatpush.msra.mxu0 0.0
        %1173 = vmatpush.msra.mxu0 0.0
        %1174 = vmatpush.msra.mxu0 0.0
        %1175 = vmatpush.msra.mxu0 0.0
        %1176 = vmatpush.msra.mxu0 0.0
        %1177 = vmatpush.msra.mxu0 0.0
        %1178 = vmatpush.msra.mxu0 0.0
        %1179 = vmatpush.msra.mxu0 0.0
        %1180 = vmatpush.msra.mxu0 %v1160
        %1181 = vmatpush.msra.mxu0 %v1159
        %1182 = vmatpush.msra.mxu0 %v1158
        %1183 = vmatpush.msra.mxu0 %v1157
        %1184 = vmatmul.f32.gmra.mxu0 %v1166
        %v1185 = vpop.f32.mrf.mxu0
        %v1186 = vadd.f32 %v1163, %v1185
        %1187 = vdwg.mxu0
        %v1188 = vadd.f32 %v1186, %v802
        %v1189 = vld [vmem:[%s780] sm:$0x1]
        %v1190 = vld [vmem:[%s642] sm:$0x1]
        %v1191 = vsel %vm807, %v1188, 0.0
        %1192 = vadd.xlane.f32.xlu0 %v1191
        %v1193 = vpop.xlane.xlu0 %1192
        %v1194 = vrcp.pop 32.0
        %v1195 = vmul.f32 32.0, %v1194
        %v1196 = vsub.f32 1.0, %v1195
        %v1197 = vmul.f32 %v1194, %v1196
        %v1198 = vadd.f32 %v1194, %v1197
        %vm1199 = vweird.f32 %v1194
        %v1200 = vsel %vm1199, %v1194, %v1198
        %v1201 = vmul.f32 %v1193, %v1200
        %v1202 = vmul.f32 %v1188, %v1188
        %v1203 = vsel %vm807, %v1202, 0.0
        %1204 = vadd.xlane.f32.xlu0 %v1203
        %v1205 = vpop.xlane.xlu0 %1204
        %v1206 = vmul.f32 %v1205, %v1200
        %v1207 = vmul.f32 %v1201, %v1201
        %v1208 = vsub.f32 %v1206, %v1207
        %v1209 = vmax.f32 %v1208, 0.0
        %v1210 = vsub.f32 %v1188, %v1201
        %v1211 = vadd.f32 %v1209, 1e-05
        %v1212 = vrsqrt.pop %v1211
        %v1213 = vmul.f32 %v1212, %v1211
        %v1214 = vmul.f32 %v1213, %v1212
        %v1215 = vmul.f32 0.5, %v1214
        %v1216 = vsub.f32 1.5, %v1215
        %v1217 = vmul.f32 %v1212, %v1216
        %vm1218 = vweird.f32 %v1211
        %vm1219 = vweird.f32 %v1212
        %vm1220 = vmor %vm1218, %vm1219
        %v1221 = vsel %vm1220, %v1212, %v1217
        %v1222 = vmul.f32 %v1210, %v1221
        %v1224 = vperm.slane %v1189, 0
        %v1226 = vmul.f32 %v1222, %v1224
        %v1228 = vperm.slane %v1190, 0
        %v1230 = vadd.f32 %v1226, %v1228
        %v1231 = vld [vmem:[%s652] sm:$0xff]
        %v1232 = vld [vmem:[%s652 + $0x8] sm:$0xff]
        %v1233 = vld [vmem:[%s652 + $0x10] sm:$0xff]
        %v1234 = vld [vmem:[%s652 + $0x18] sm:$0xff]
        %v1235 = vld [vmem:[%s783] sm:$0x1]
        %v1237 = vperm.slane %v1235, 0
        %v1240 = vsel %vm807, %v1230, 0
        %1242 = vmatpush.msra.mxu0 0.0
        %1243 = vmatpush.msra.mxu0 0.0
        %1244 = vmatpush.msra.mxu0 0.0
        %1245 = vmatpush.msra.mxu0 0.0
        %1246 = vmatpush.msra.mxu0 0.0
        %1247 = vmatpush.msra.mxu0 0.0
        %1248 = vmatpush.msra.mxu0 0.0
        %1249 = vmatpush.msra.mxu0 0.0
        %1250 = vmatpush.msra.mxu0 0.0
        %1251 = vmatpush.msra.mxu0 0.0
        %1252 = vmatpush.msra.mxu0 0.0
        %1253 = vmatpush.msra.mxu0 0.0
        %1254 = vmatpush.msra.mxu0 %v1234
        %1255 = vmatpush.msra.mxu0 %v1233
        %1256 = vmatpush.msra.mxu0 %v1232
        %1257 = vmatpush.msra.mxu0 %v1231
        %1258 = vmatmul.f32.gmra.mxu0 %v1240
        %v1259 = vpop.f32.mrf.mxu0
        %v1260 = vadd.f32 %v1237, %v1259
        %1261 = vdwg.mxu0
        %v1262 = vmax.f32 %v1260, 0.0
        %v1263 = vld [vmem:[%s788] sm:$0xff]
        %v1264 = vld [vmem:[%s788 + $0x8] sm:$0xff]
        %v1265 = vld [vmem:[%s788 + $0x10] sm:$0xff]
        %v1266 = vld [vmem:[%s788 + $0x18] sm:$0xff]
        %v1267 = vld [vmem:[%s788 + $0x20] sm:$0xff]
        %v1268 = vld [vmem:[%s788 + $0x28] sm:$0xff]
        %v1269 = vld [vmem:[%s788 + $0x30] sm:$0xff]
        %v1270 = vld [vmem:[%s788 + $0x38] sm:$0xff]
        %v1271 = vld [vmem:[%s791] sm:$0x1]
        %v1273 = vperm.slane %v1271, 0
        %vm1275 = vcmask 523264
        %v1277 = vsel %vm1275, %v1262, 0
        %1279 = vmatpush.msra.mxu0 0.0
        %1280 = vmatpush.msra.mxu0 0.0
        %1281 = vmatpush.msra.mxu0 0.0
        %1282 = vmatpush.msra.mxu0 0.0
        %1283 = vmatpush.msra.mxu0 0.0
        %1284 = vmatpush.msra.mxu0 0.0
        %1285 = vmatpush.msra.mxu0 0.0
        %1286 = vmatpush.msra.mxu0 0.0
        %1287 = vmatpush.msra.mxu0 %v1270
        %1288 = vmatpush.msra.mxu0 %v1269
        %1289 = vmatpush.msra.mxu0 %v1268
        %1290 = vmatpush.msra.mxu0 %v1267
        %1291 = vmatpush.msra.mxu0 %v1266
        %1292 = vmatpush.msra.mxu0 %v1265
        %1293 = vmatpush.msra.mxu0 %v1264
        %1294 = vmatpush.msra.mxu0 %v1263
        %1295 = vmatmul.f32.gmra.mxu0 %v1277
        %v1296 = vpop.f32.mrf.mxu0
        %v1297 = vadd.f32 %v1273, %v1296
        %1298 = vdwg.mxu0
        %v1299 = vadd.f32 %v1297, %v1230
        %v1300 = vld [vmem:[%s794] sm:$0x1]
        %v1301 = vld [vmem:[%s661] sm:$0x1]
        %v1302 = vsel %vm807, %v1299, 0.0
        %1303 = vadd.xlane.f32.xlu0 %v1302
        %v1304 = vpop.xlane.xlu0 %1303
        %v1305 = vmul.f32 %v1304, %v1200
        %v1306 = vmul.f32 %v1299, %v1299
        %v1307 = vsel %vm807, %v1306, 0.0
        %1308 = vadd.xlane.f32.xlu0 %v1307
        %v1309 = vpop.xlane.xlu0 %1308
        %v1310 = vmul.f32 %v1309, %v1200
        %v1311 = vmul.f32 %v1305, %v1305
        %v1312 = vsub.f32 %v1310, %v1311
        %v1313 = vmax.f32 %v1312, 0.0
        %v1314 = vsub.f32 %v1299, %v1305
        %v1315 = vadd.f32 %v1313, 1e-05
        %v1316 = vrsqrt.pop %v1315
        %v1317 = vmul.f32 %v1316, %v1315
        %v1318 = vmul.f32 %v1317, %v1316
        %v1319 = vmul.f32 0.5, %v1318
        %v1320 = vsub.f32 1.5, %v1319
        %v1321 = vmul.f32 %v1316, %v1320
        %vm1322 = vweird.f32 %v1315
        %vm1323 = vweird.f32 %v1316
        %vm1324 = vmor %vm1322, %vm1323
        %v1325 = vsel %vm1324, %v1316, %v1321
        %v1326 = vmul.f32 %v1314, %v1325
        %v1328 = vperm.slane %v1300, 0
        %v1330 = vmul.f32 %v1326, %v1328
        %v1332 = vperm.slane %v1301, 0
        %v1334 = vadd.f32 %v1330, %v1332
        %1335 = vst.msk [vmem:[%s759] sm:$0xff] %vm807, %v1334
        %s1336 = sand.u32 %s421, 1
        %s1337 = scalar_lea.sflag [#allocation4], %s1336
        %s1338 = sand.u32 %s421, 1
        %s1339 = smul.addr %s1338, 8
        %s1340 = scalar_lea.vmem [#allocation11], %s1339
        // Predicated region
        $region101: #{tpu_custom_call.1} parent=75 // pred_check
          %p1341 = pneg %p431
        $region102: #{tpu_custom_call.1} parent=75 // pred_check_branch
          %1343 = sbr.rel (%p1341) target = $region104
        $region103: #{tpu_custom_call.1} parent=75 // pred_region
          %1345 = vsyncadd %s1337, 0
          %s1346 = smul.addr %s41, 8
          %s1347 = scalar_lea.hbm %s14, %s1346
          %s1349 = sshll.u32 %s1340, 4
          %s1350 = int_to_ptr.vmem [resolvable:$true] %s1349
          %s1351 = sshll.u32 %s1347, 4
          %s1352 = int_to_ptr.hbm [resolvable:$true] %s1351
          %1354 = dma.vmem_to_hbm [thread:$0]  %s1350, 128, %s1352, %s1337
        $region104: #{tpu_custom_call.1} parent=75 // pred_fallthru
          _
      $region76: #{tpu_custom_call.1} parent=5 // pred_fallthru
        _
      %p1355 = scmp.le.s32.totalorder 2, %s32
      // Predicated region
      $region105: #{tpu_custom_call.1} parent=5 // pred_check
        %p1356 = pneg %p1355
      $region106: #{tpu_custom_call.1} parent=5 // pred_check_branch
        %1358 = sbr.rel (%p1356) target = $region108
      $region107: #{tpu_custom_call.1} parent=5 // pred_region
        %s1359 = ssub.s32 %s32, 2
        // Predicated region
        $region109: #{tpu_custom_call.1} parent=107 // pred_check
          %p1360 = pneg %p437
        $region110: #{tpu_custom_call.1} parent=107 // pred_check_branch
          %1362 = sbr.rel (%p1360) target = $region112
        $region111: #{tpu_custom_call.1} parent=107 // pred_region
          %s1363 = sand.u32 %s422, 1
          %s1364 = scalar_lea.sflag [#allocation4], %s1363
          %s1365 = sand.u32 %s422, 1
          %s1366 = smul.addr %s1365, 8
          %s1367 = scalar_lea.vmem [#allocation11], %s1366
          %1369 = dma.done %s1364, 128
        $region112: #{tpu_custom_call.1} parent=107 // pred_fallthru
          _
      $region108: #{tpu_custom_call.1} parent=5 // pred_fallthru
        _
    $region6: #{tpu_custom_call.1} parent=1 // loop_footer
      %s36 = sadd.s32 1, %s32
    $region7: #{tpu_custom_call.1} parent=1 // loop_footer_branch
      %31 = sbr.rel target = $region3
    $region8: #{tpu_custom_call.1} parent=1 // loop_exit
      _
    %1370 = vsyncpa [#allocation3], 1
    %s1371 = scalar_lea.sflag [#allocation3], 1
    %1372 = vsyncpa %s1371, 1
    %1373 = vsyncpa [#allocation6], 1
    %s1374 = scalar_lea.sflag [#allocation6], 1
    %1375 = vsyncpa %s1374, 1
    %1376 = vsyncpa [#allocation9], 1
    %s1377 = scalar_lea.sflag [#allocation9], 1
    %1378 = vsyncpa %s1377, 1
    %1379 = vsyncpa [#allocation4], 1
    %s1380 = scalar_lea.sflag [#allocation4], 1
    %1381 = vsyncpa %s1380, 1

</llo_original>
